<compile_context>
chip_gen: v5e
topology: v5e:2x2
jax: 0.10.0
libtpu: 0.0.40
codegen_flags: <defaults>
</compile_context>

<pallas_src>
import jax
import jax.numpy as jnp
from jax import lax
from jax.experimental import pallas as pl
from jax.experimental.pallas import tpu as pltpu


def _round_up(x, m):
    return (x + m - 1) // m * m


def _vmem_capacity_bytes():
    try:
        return int(pltpu.get_tpu_info().vmem_capacity_bytes)
    except Exception:
        return 64 * 1024 * 1024          # conservative: v7x per-TensorCore VMEM


def _choose_tiles(n, d_pad, tq=None, tk=None):
    """Pick (tq, tk) honoring (8,128)/bf16 tiling, megacore and VMEM budget."""
    n128 = _round_up(n, 128)
    cap = _vmem_capacity_bytes()
    budget = int(0.6 * cap)
    auto_tk = tk is None

    if tq is None:
        # v5e/v6e (128 MiB VMEM): push tq toward the streamed-K roofline.
        tq = 512 if cap > 96 * 1024 * 1024 else 256
    if tk is None:
        tk = 512

    tq = _round_up(max(128, min(tq, n128)), 128)
    tk = _round_up(max(128, min(tk, n128)), 128)

    # v7x megacore: keep >= 2 tiles on the "parallel" row axis when possible.
    if n128 >= 256:
        tq = min(tq, _round_up((n + 1) // 2, 128))

    # Resident-K fast path (auto tiling only): whole padded K as one column
    # tile -> K is DMA'd once and the online softmax collapses to one step.
    if auto_tk and n128 * d_pad * 2 <= 4 * 1024 * 1024:
        tk = n128

    def est(tq_, tk_):
        in_bytes = 2 * (tq_ + tk_) * d_pad * 2     # dbl-buffered bf16 q/k tiles
        lbl_bytes = 2 * (tq_ + tk_) * 4            # dbl-buffered int32 labels
        tmp_bytes = 6 * tq_ * tk_ * 4              # (tq,tk) f32 temporaries
        acc_bytes = 8 * tq_ * 4                    # scratch accumulators + outs
        return in_bytes + lbl_bytes + tmp_bytes + acc_bytes

    while est(tq, tk) > budget and tk > 128:
        tk = _round_up(tk // 2, 128)
    while est(tq, tk) > budget and tq > 128:
        tq = _round_up(tq // 2, 128)

    vmem_limit = int(min(max(2 * est(tq, tk), 16 * 1024 * 1024),
                         int(0.72 * cap)))
    return tq, tk, vmem_limit


def _make_supcon_kernel(n_real, tq, tk):
    """n_real, tq, tk are Python ints (compile-time constants only)."""

    def kernel(q_ref, ql_ref, k_ref, kl_ref,
               contrib_ref, valid_ref,
               m_sc, l_sc, spos_sc, cnt_sc):
        qi = pl.program_id(0)
        kj = pl.program_id(1)

        # ---- init per-row-tile accumulators on the first column step ----
        @pl.when(kj == 0)
        def _():
            m_sc[...] = jnp.full_like(m_sc, -jnp.inf)
            l_sc[...] = jnp.zeros_like(l_sc)
            spos_sc[...] = jnp.zeros_like(spos_sc)
            cnt_sc[...] = jnp.zeros_like(cnt_sc)

        # ---- MXU: bf16 q (pre-scaled by 1/tau) x bf16 k, f32 accumulation,
        #      shared D axis contracted directly (no explicit transpose) ----
        sim = lax.dot_general(
            q_ref[...], k_ref[...],
            dimension_numbers=(((1,), (1,)), ((), ())),
            preferred_element_type=jnp.float32)                  # (tq, tk)

        # ---- masks from SMALL iotas; broadcast only at the compares ----
        row_idx = qi * tq + lax.broadcasted_iota(jnp.int32, (tq, 1), 0)
        col_idx = kj * tk + lax.broadcasted_iota(jnp.int32, (1, tk), 1)
        not_diag = row_idx != col_idx                            # (tq, tk)
        col_ok = col_idx < n_real                                # (1, tk)
        in_denom = jnp.logical_and(not_diag, col_ok)

        # Single masked-logits path.  Safe because padding sits at the column
        # tail: the first column tile always has real (unmasked) entries, so
        # m_sc is finite before any fully-masked tile and exp(-1e9 - m)
        # underflows to exactly 0.
        logits = jnp.where(in_denom, sim, -1e9)

        # ---- online softmax denominator (f32 exp/log on the EUP) ----
        m_new = jnp.maximum(m_sc[...], jnp.max(logits, axis=-1, keepdims=True))
        alpha = jnp.exp(m_sc[...] - m_new)
        l_sc[...] = alpha * l_sc[...] + jnp.sum(jnp.exp(logits - m_new),
                                                axis=-1, keepdims=True)
        m_sc[...] = m_new

        # ---- positive-pair accumulation (raw logits: no rescaling needed).
        # Padded rows/columns carry label -1 while real labels are >= 0, and
        # padded columns are already excluded by in_denom, so no row mask. ----
        pos = jnp.logical_and(ql_ref[...] == kl_ref[...], in_denom)
        posf = pos.astype(jnp.float32)
        spos_sc[...] += jnp.sum(posf * logits, axis=-1, keepdims=True)
        cnt_sc[...] += jnp.sum(posf, axis=-1, keepdims=True)

        # ---- fold per-row partials on the last column step ----
        @pl.when(kj == pl.num_programs(1) - 1)
        def _():
            cnt = cnt_sc[...]
            log_denom = m_sc[...] + jnp.log(l_sc[...] + 1e-12)
            mean_lp = (spos_sc[...] - cnt * log_denom) / jnp.maximum(cnt, 1.0)
            valid = (cnt > 0.0).astype(jnp.float32)
            contrib_ref[...] = valid * mean_lp
            valid_ref[...] = valid

    return kernel


def supcon_loss_pallas(all_embeddings, all_labels, temperature=0.1,
                       tq=None, tk=None):
    """Supervised-contrastive loss on already-gathered embeddings/labels."""
    n, d = all_embeddings.shape
    d_pad = _round_up(d, 128)                      # lane width

    tq, tk, vmem_limit = _choose_tiles(n, d_pad, tq, tk)
    n_row_pad = _round_up(n, tq)
    n_col_pad = _round_up(n, tk)
    grid = (n_row_pad // tq, n_col_pad // tk)

    # ---- hoisted preprocessing: normalise once, fold 1/tau into the q side,
    #      store bf16 (halves DMA traffic, removes per-step VPU/EUP work) ----
    z = all_embeddings.astype(jnp.float32)
    z = z * lax.rsqrt(jnp.sum(z * z, axis=-1, keepdims=True) + 1e-12)
    inv_tau = 1.0 / float(temperature)
    q_emb = jnp.zeros((n_row_pad, d_pad), jnp.bfloat16).at[:n, :d].set(
        (z * inv_tau).astype(jnp.bfloat16))
    k_emb = jnp.zeros((n_col_pad, d_pad), jnp.bfloat16).at[:n, :d].set(
        z.astype(jnp.bfloat16))

    # TODO(synk): real labels are assumed nonnegative; -1 is the pad sentinel.
    lbl = all_labels.astype(jnp.int32)
    q_lbl = jnp.full((n_row_pad, 1), -1, jnp.int32).at[:n, 0].set(lbl)
    k_lbl = jnp.full((1, n_col_pad), -1, jnp.int32).at[0, :n].set(lbl)

    kernel = _make_supcon_kernel(n, tq, tk)

    contrib, valid = pl.pallas_call(
        kernel,
        out_shape=(jax.ShapeDtypeStruct((n_row_pad, 1), jnp.float32),
                   jax.ShapeDtypeStruct((n_row_pad, 1), jnp.float32)),
        grid_spec=pltpu.PrefetchScalarGridSpec(
            num_scalar_prefetch=0,
            grid=grid,
            in_specs=[
                pl.BlockSpec((tq, d_pad), lambda qi, kj: (qi, 0)),   # q rows (bf16)
                pl.BlockSpec((tq, 1), lambda qi, kj: (qi, 0)),       # q labels
                pl.BlockSpec((tk, d_pad), lambda qi, kj: (kj, 0)),   # k rows (bf16)
                pl.BlockSpec((1, tk), lambda qi, kj: (0, kj)),       # k labels
            ],
            out_specs=[
                pl.BlockSpec((tq, 1), lambda qi, kj: (qi, 0)),
                pl.BlockSpec((tq, 1), lambda qi, kj: (qi, 0)),
            ],
            scratch_shapes=[pltpu.VMEM((tq, 1), jnp.float32)
                            for _ in range(4)],
        ),
        compiler_params=pltpu.CompilerParams(
            dimension_semantics=("parallel", "arbitrary"),
            vmem_limit_bytes=vmem_limit),
    )(q_emb, q_lbl, k_emb, k_lbl)

    # Final scalar mean over valid anchors (tiny JAX reduction over partials).
    return -jnp.sum(contrib) / jnp.maximum(jnp.sum(valid), 1.0)


def distributed_loss_wrapper_forward(per_rank_embeddings, per_rank_labels,
                                     dim=0, temperature=0.1, tq=None, tk=None):
    """Forward of DistributedLossWrapper.

    per_rank_embeddings / per_rank_labels: lists of per-rank shards (one per
    simulated process), mirroring the outputs of GatherLayer / all_gather.
    """
    # torch.cat(GatherLayer.apply(embeddings), dim=self.dim)
    all_embeddings = jnp.concatenate(per_rank_embeddings, axis=dim)
    # torch.cat(all_gather(labels), dim=self.dim)
    all_labels = jnp.concatenate(per_rank_labels, axis=dim)
    # self.loss(all_embeddings, all_labels)  -- hot path in Pallas
    return supcon_loss_pallas(all_embeddings, all_labels, temperature,
                              tq=tq, tk=tk)


def _supcon_loss_ref(all_embeddings, all_labels, temperature=0.1,
                     match_kernel_precision=True):
    """Pure-JAX reference for correctness checking."""
    z = all_embeddings.astype(jnp.float32)
    z = z * lax.rsqrt(jnp.sum(z * z, axis=-1, keepdims=True) + 1e-12)
    if match_kernel_precision:
        # Kernel feeds the MXU bf16 operands with 1/tau folded into q.
        q = (z / temperature).astype(jnp.bfloat16).astype(jnp.float32)
        k = z.astype(jnp.bfloat16).astype(jnp.float32)
        sim = q @ k.T
    else:
        sim = (z @ z.T) / temperature
    n = z.shape[0]
    not_diag = ~jnp.eye(n, dtype=bool)
    pos = (all_labels[:, None] == all_labels[None, :]) & not_diag
    logits = jnp.where(not_diag, sim, -1e9)
    row_max = jnp.max(logits, axis=-1, keepdims=True)
    expd = jnp.where(not_diag, jnp.exp(logits - row_max), 0.0)
    log_prob = logits - row_max - jnp.log(jnp.sum(expd, -1, keepdims=True) + 1e-12)
    posf = pos.astype(jnp.float32)
    cnt = jnp.sum(posf, -1, keepdims=True)
    mean_lp = jnp.sum(posf * log_prob, -1, keepdims=True) / jnp.maximum(cnt, 1.0)
    valid = (cnt > 0).astype(jnp.float32)
    return -jnp.sum(valid * mean_lp) / jnp.maximum(jnp.sum(valid), 1.0)


if __name__ == "__main__":
    key = jax.random.PRNGKey(0)
    world_size = 2        # simulated number of distributed processes
    batch = 128           # per-rank batch -> gathered N = 256
    hidden = 32           # embedding dim (padded to 128 lanes in the wrapper)
    num_classes = 4
    dim = 0               # DistributedLossWrapper(loss, dim=0)
    temperature = 0.1

    k_emb_key, k_lbl_key = jax.random.split(key)
    full_emb = jax.random.normal(k_emb_key, (world_size * batch, hidden),
                                 jnp.float32)
    full_lbl = jax.random.randint(k_lbl_key, (world_size * batch,), 0,
                                  num_classes, jnp.int32)

    # Per-rank shards, as each process would hold before the all_gather.
    per_rank_emb = [full_emb[r * batch:(r + 1) * batch] for r in range(world_size)]
    per_rank_lbl = [full_lbl[r * batch:(r + 1) * batch] for r in range(world_size)]

    ref = _supcon_loss_ref(full_emb, full_lbl, temperature=temperature)

    # 1) Auto tiling: >=2 row tiles + resident-K fast path (grid (2, 1)).
    loss_auto = distributed_loss_wrapper_forward(per_rank_emb, per_rank_lbl,
                                                 dim=dim,
                                                 temperature=temperature)
    loss_auto = jax.block_until_ready(loss_auto)
    assert bool(jnp.isfinite(loss_auto)), loss_auto
    assert jnp.allclose(loss_auto, ref, rtol=1e-2, atol=1e-2), (loss_auto, ref)

    # 2) Explicit small tiles: exercises the multi-step online softmax (grid (2, 2)).
    loss_tiled = distributed_loss_wrapper_forward(per_rank_emb, per_rank_lbl,
                                                  dim=dim,
                                                  temperature=temperature,
                                                  tq=128, tk=128)
    loss_tiled = jax.block_until_ready(loss_tiled)
    assert bool(jnp.isfinite(loss_tiled)), loss_tiled
    assert jnp.allclose(loss_tiled, ref, rtol=1e-2, atol=1e-2), (loss_tiled, ref)

    # TODO(synk): GatherLayer's backward (scatter of the local rank's grad) and
    # the DDP wrapping of parameterised losses are training-time details; only
    # the forward semantics are implemented here.
    print("KERNEL_OK")
</pallas_src>

<mosaic_0001>
module attributes {stable_mosaic.version = 11 : i64} {
  func.func @kernel(%arg0: i32, %arg1: i32, %arg2: memref<128x128xbf16, #tpu.memory_space<vmem>>, %arg3: memref<128x1xi32, #tpu.memory_space<vmem>>, %arg4: memref<256x128xbf16, #tpu.memory_space<vmem>>, %arg5: memref<1x256xi32, #tpu.memory_space<vmem>>, %arg6: memref<128x1xf32, #tpu.memory_space<vmem>>, %arg7: memref<128x1xf32, #tpu.memory_space<vmem>>, %arg8: memref<128x1xf32, #tpu.memory_space<vmem>>, %arg9: memref<128x1xf32, #tpu.memory_space<vmem>>, %arg10: memref<128x1xf32, #tpu.memory_space<vmem>>, %arg11: memref<128x1xf32, #tpu.memory_space<vmem>>) attributes {dimension_semantics = [#tpu.dimension_semantics<parallel>, #tpu.dimension_semantics<arbitrary>], iteration_bounds = array<i64: 2, 1>, scalar_prefetch = 0 : i64, scratch_operands = 4 : i64, tpu.core_type = #tpu.core_type<tc>, window_params = [{transform_indices = @transform_0, window_bounds = array<i64: 128, 128>}, {transform_indices = @transform_1, window_bounds = array<i64: 128, 1>}, {transform_indices = @transform_2, window_bounds = array<i64: 256, 128>}, {transform_indices = @transform_3, window_bounds = array<i64: 1, 256>}, {transform_indices = @transform_4, window_bounds = array<i64: 128, 1>}, {transform_indices = @transform_5, window_bounds = array<i64: 128, 1>}]} {
    %c0_i32 = arith.constant 0 : i32
    %0 = arith.cmpi eq, %arg1, %c0_i32 : i32
    %1 = arith.extui %0 : i1 to i32
    %c0_i32_0 = arith.constant 0 : i32
    %2 = arith.cmpi ne, %1, %c0_i32_0 : i32
    scf.if %2 {
      %cst_34 = arith.constant 0xFF800000 : f32
      %62 = vector.broadcast %cst_34 : f32 to vector<128x1xf32>
      %c0_35 = arith.constant 0 : index
      %c0_36 = arith.constant 0 : index
      %63 = vector.load %arg8[%c0_35, %c0_36] : memref<128x1xf32, #tpu.memory_space<vmem>>, vector<128x1xf32>
      tpu.vector_store %arg8[%c0_35, %c0_36], %62 {strides = array<i32>} : memref<128x1xf32, #tpu.memory_space<vmem>>, vector<128x1xf32>,
      %cst_37 = arith.constant 0.000000e+00 : f32
      %64 = vector.broadcast %cst_37 : f32 to vector<128x1xf32>
      %c0_38 = arith.constant 0 : index
      %c0_39 = arith.constant 0 : index
      %65 = vector.load %arg9[%c0_38, %c0_39] : memref<128x1xf32, #tpu.memory_space<vmem>>, vector<128x1xf32>
      tpu.vector_store %arg9[%c0_38, %c0_39], %64 {strides = array<i32>} : memref<128x1xf32, #tpu.memory_space<vmem>>, vector<128x1xf32>,
      %cst_40 = arith.constant 0.000000e+00 : f32
      %66 = vector.broadcast %cst_40 : f32 to vector<128x1xf32>
      %c0_41 = arith.constant 0 : index
      %c0_42 = arith.constant 0 : index
      %67 = vector.load %arg10[%c0_41, %c0_42] : memref<128x1xf32, #tpu.memory_space<vmem>>, vector<128x1xf32>
      tpu.vector_store %arg10[%c0_41, %c0_42], %66 {strides = array<i32>} : memref<128x1xf32, #tpu.memory_space<vmem>>, vector<128x1xf32>,
      %cst_43 = arith.constant 0.000000e+00 : f32
      %68 = vector.broadcast %cst_43 : f32 to vector<128x1xf32>
      %c0_44 = arith.constant 0 : index
      %c0_45 = arith.constant 0 : index
      %69 = vector.load %arg11[%c0_44, %c0_45] : memref<128x1xf32, #tpu.memory_space<vmem>>, vector<128x1xf32>
      tpu.vector_store %arg11[%c0_44, %c0_45], %68 {strides = array<i32>} : memref<128x1xf32, #tpu.memory_space<vmem>>, vector<128x1xf32>,
    } else {
    }
    %c0 = arith.constant 0 : index
    %c0_1 = arith.constant 0 : index
    %3 = vector.load %arg2[%c0, %c0_1] : memref<128x128xbf16, #tpu.memory_space<vmem>>, vector<128x128xbf16>
    %c0_2 = arith.constant 0 : index
    %c0_3 = arith.constant 0 : index
    %4 = vector.load %arg4[%c0_2, %c0_3] : memref<256x128xbf16, #tpu.memory_space<vmem>>, vector<256x128xbf16>
    %cst = arith.constant dense<0.000000e+00> : vector<128x256xf32>
    %5 = tpu.matmul %3, %4, %cst {dimension_numbers = #tpu.dot_dimension_numbers<[1], [1], [0], [0], [0, 0, 1, 0], [], []>} : vector<128x128xbf16>, vector<256x128xbf16>, vector<128x256xf32> -> vector<128x256xf32>
    %c128_i32 = arith.constant 128 : i32
    %6 = arith.muli %arg0, %c128_i32 : i32
    %7 = tpu.iota {dimensions = array<i32: 0>} : vector<128x1xi32>
    %8 = vector.broadcast %6 : i32 to vector<128x1xi32>
    %9 = arith.addi %8, %7 : vector<128x1xi32>
    %c256_i32 = arith.constant 256 : i32
    %10 = arith.muli %arg1, %c256_i32 : i32
    %11 = tpu.iota {dimensions = array<i32: 1>} : vector<1x256xi32>
    %12 = vector.broadcast %10 : i32 to vector<1x256xi32>
    %13 = arith.addi %12, %11 : vector<1x256xi32>
    %14 = vector.broadcast %9 : vector<128x1xi32> to vector<128x256xi32>
    %15 = vector.broadcast %13 : vector<1x256xi32> to vector<128x256xi32>
    %16 = arith.cmpi ne, %14, %15 : vector<128x256xi32>
    %c256_i32_4 = arith.constant 256 : i32
    %17 = vector.broadcast %c256_i32_4 : i32 to vector<1x256xi32>
    %18 = arith.cmpi slt, %13, %17 : vector<1x256xi32>
    %19 = vector.broadcast %18 : vector<1x256xi1> to vector<128x256xi1>
    %20 = arith.andi %16, %19 : vector<128x256xi1>
    %cst_5 = arith.constant -1.000000e+09 : f32
    %21 = vector.broadcast %cst_5 : f32 to vector<128x256xf32>
    %22 = arith.select %20, %5, %21 : vector<128x256xi1>, vector<128x256xf32>
    %c0_6 = arith.constant 0 : index
    %c0_7 = arith.constant 0 : index
    %23 = vector.load %arg8[%c0_6, %c0_7] : memref<128x1xf32, #tpu.memory_space<vmem>>, vector<128x1xf32>
    %cst_8 = arith.constant dense<0xFF800000> : vector<128xf32>
    %24 = vector.multi_reduction <maximumf>, %22, %cst_8 [1] : vector<128x256xf32> to vector<128xf32>
    %25 = vector.shape_cast %24 : vector<128xf32> to vector<128x1xf32>
    %26 = arith.maximumf %23, %25 : vector<128x1xf32>
    %c0_9 = arith.constant 0 : index
    %c0_10 = arith.constant 0 : index
    %27 = vector.load %arg8[%c0_9, %c0_10] : memref<128x1xf32, #tpu.memory_space<vmem>>, vector<128x1xf32>
    %28 = arith.subf %27, %26 : vector<128x1xf32>
    %29 = math.exp %28 : vector<128x1xf32>
    %c0_11 = arith.constant 0 : index
    %c0_12 = arith.constant 0 : index
    %30 = vector.load %arg9[%c0_11, %c0_12] : memref<128x1xf32, #tpu.memory_space<vmem>>, vector<128x1xf32>
    %31 = arith.mulf %29, %30 : vector<128x1xf32>
    %32 = vector.broadcast %26 : vector<128x1xf32> to vector<128x256xf32>
    %33 = arith.subf %22, %32 : vector<128x256xf32>
    %34 = math.exp %33 : vector<128x256xf32>
    %cst_13 = arith.constant dense<0.000000e+00> : vector<128xf32>
    %35 = vector.multi_reduction <add>, %34, %cst_13 [1] : vector<128x256xf32> to vector<128xf32>
    %36 = vector.shape_cast %35 : vector<128xf32> to vector<128x1xf32>
    %37 = arith.addf %31, %36 : vector<128x1xf32>
    %c0_14 = arith.constant 0 : index
    %c0_15 = arith.constant 0 : index
    %38 = vector.load %arg9[%c0_14, %c0_15] : memref<128x1xf32, #tpu.memory_space<vmem>>, vector<128x1xf32>
    tpu.vector_store %arg9[%c0_14, %c0_15], %37 {strides = array<i32>} : memref<128x1xf32, #tpu.memory_space<vmem>>, vector<128x1xf32>,
    %c0_16 = arith.constant 0 : index
    %c0_17 = arith.constant 0 : index
    %39 = vector.load %arg8[%c0_16, %c0_17] : memref<128x1xf32, #tpu.memory_space<vmem>>, vector<128x1xf32>
    tpu.vector_store %arg8[%c0_16, %c0_17], %26 {strides = array<i32>} : memref<128x1xf32, #tpu.memory_space<vmem>>, vector<128x1xf32>,
    %c0_18 = arith.constant 0 : index
    %c0_19 = arith.constant 0 : index
    %40 = vector.load %arg3[%c0_18, %c0_19] : memref<128x1xi32, #tpu.memory_space<vmem>>, vector<128x1xi32>
    %c0_20 = arith.constant 0 : index
    %c0_21 = arith.constant 0 : index
    %41 = vector.load %arg5[%c0_20, %c0_21] : memref<1x256xi32, #tpu.memory_space<vmem>>, vector<1x256xi32>
    %42 = vector.broadcast %40 : vector<128x1xi32> to vector<128x256xi32>
    %43 = vector.broadcast %41 : vector<1x256xi32> to vector<128x256xi32>
    %44 = arith.cmpi eq, %42, %43 : vector<128x256xi32>
    %45 = arith.andi %44, %20 : vector<128x256xi1>
    %46 = arith.extui %45 : vector<128x256xi1> to vector<128x256xi32>
    %47 = arith.sitofp %46 : vector<128x256xi32> to vector<128x256xf32>
    %c0_22 = arith.constant 0 : index
    %c0_23 = arith.constant 0 : index
    %48 = vector.load %arg10[%c0_22, %c0_23] : memref<128x1xf32, #tpu.memory_space<vmem>>, vector<128x1xf32>
    %49 = arith.mulf %47, %22 : vector<128x256xf32>
    %cst_24 = arith.constant dense<0.000000e+00> : vector<128xf32>
    %50 = vector.multi_reduction <add>, %49, %cst_24 [1] : vector<128x256xf32> to vector<128xf32>
    %51 = vector.shape_cast %50 : vector<128xf32> to vector<128x1xf32>
    %52 = arith.addf %48, %51 : vector<128x1xf32>
    %c0_25 = arith.constant 0 : index
    %c0_26 = arith.constant 0 : index
    %53 = vector.load %arg10[%c0_25, %c0_26] : memref<128x1xf32, #tpu.memory_space<vmem>>, vector<128x1xf32>
    tpu.vector_store %arg10[%c0_25, %c0_26], %52 {strides = array<i32>} : memref<128x1xf32, #tpu.memory_space<vmem>>, vector<128x1xf32>,
    %c0_27 = arith.constant 0 : index
    %c0_28 = arith.constant 0 : index
    %54 = vector.load %arg11[%c0_27, %c0_28] : memref<128x1xf32, #tpu.memory_space<vmem>>, vector<128x1xf32>
    %cst_29 = arith.constant dense<0.000000e+00> : vector<128xf32>
    %55 = vector.multi_reduction <add>, %47, %cst_29 [1] : vector<128x256xf32> to vector<128xf32>
    %56 = vector.shape_cast %55 : vector<128xf32> to vector<128x1xf32>
    %57 = arith.addf %54, %56 : vector<128x1xf32>
    %c0_30 = arith.constant 0 : index
    %c0_31 = arith.constant 0 : index
    %58 = vector.load %arg11[%c0_30, %c0_31] : memref<128x1xf32, #tpu.memory_space<vmem>>, vector<128x1xf32>
    tpu.vector_store %arg11[%c0_30, %c0_31], %57 {strides = array<i32>} : memref<128x1xf32, #tpu.memory_space<vmem>>, vector<128x1xf32>,
    %c0_i32_32 = arith.constant 0 : i32
    %59 = arith.cmpi eq, %arg1, %c0_i32_32 : i32
    %60 = arith.extui %59 : i1 to i32
    %c0_i32_33 = arith.constant 0 : i32
    %61 = arith.cmpi ne, %60, %c0_i32_33 : i32
    scf.if %61 {
      %c0_34 = arith.constant 0 : index
      %c0_35 = arith.constant 0 : index
      %62 = vector.load %arg11[%c0_34, %c0_35] : memref<128x1xf32, #tpu.memory_space<vmem>>, vector<128x1xf32>
      %c0_36 = arith.constant 0 : index
      %c0_37 = arith.constant 0 : index
      %63 = vector.load %arg8[%c0_36, %c0_37] : memref<128x1xf32, #tpu.memory_space<vmem>>, vector<128x1xf32>
      %c0_38 = arith.constant 0 : index
      %c0_39 = arith.constant 0 : index
      %64 = vector.load %arg9[%c0_38, %c0_39] : memref<128x1xf32, #tpu.memory_space<vmem>>, vector<128x1xf32>
      %cst_40 = arith.constant 9.99999996E-13 : f32
      %65 = vector.broadcast %cst_40 : f32 to vector<128x1xf32>
      %66 = arith.addf %64, %65 : vector<128x1xf32>
      %67 = math.log %66 : vector<128x1xf32>
      %68 = arith.addf %63, %67 : vector<128x1xf32>
      %c0_41 = arith.constant 0 : index
      %c0_42 = arith.constant 0 : index
      %69 = vector.load %arg10[%c0_41, %c0_42] : memref<128x1xf32, #tpu.memory_space<vmem>>, vector<128x1xf32>
      %70 = arith.mulf %62, %68 : vector<128x1xf32>
      %71 = arith.subf %69, %70 : vector<128x1xf32>
      %cst_43 = arith.constant 1.000000e+00 : f32
      %72 = vector.broadcast %cst_43 : f32 to vector<128x1xf32>
      %73 = arith.maximumf %62, %72 : vector<128x1xf32>
      %74 = arith.divf %71, %73 : vector<128x1xf32>
      %cst_44 = arith.constant 0.000000e+00 : f32
      %75 = vector.broadcast %cst_44 : f32 to vector<128x1xf32>
      %76 = arith.cmpf ogt, %62, %75 : vector<128x1xf32>
      %77 = arith.extui %76 : vector<128x1xi1> to vector<128x1xi32>
      %78 = arith.sitofp %77 : vector<128x1xi32> to vector<128x1xf32>
      %79 = arith.mulf %78, %74 : vector<128x1xf32>
      %c0_45 = arith.constant 0 : index
      %c0_46 = arith.constant 0 : index
      %80 = vector.load %arg6[%c0_45, %c0_46] : memref<128x1xf32, #tpu.memory_space<vmem>>, vector<128x1xf32>
      tpu.vector_store %arg6[%c0_45, %c0_46], %79 {strides = array<i32>} : memref<128x1xf32, #tpu.memory_space<vmem>>, vector<128x1xf32>,
      %c0_47 = arith.constant 0 : index
      %c0_48 = arith.constant 0 : index
      %81 = vector.load %arg7[%c0_47, %c0_48] : memref<128x1xf32, #tpu.memory_space<vmem>>, vector<128x1xf32>
      tpu.vector_store %arg7[%c0_47, %c0_48], %78 {strides = array<i32>} : memref<128x1xf32, #tpu.memory_space<vmem>>, vector<128x1xf32>,
    } else {
    }
    return
  }
  func.func @transform_0(%arg0: i32, %arg1: i32) -> (i32, i32) {
    %c0_i32 = arith.constant 0 : i32
    %c0_i32_0 = arith.constant 0 : i32
    return %arg0, %c0_i32 : i32, i32
  }
  func.func @transform_1(%arg0: i32, %arg1: i32) -> (i32, i32) {
    %c0_i32 = arith.constant 0 : i32
    %c0_i32_0 = arith.constant 0 : i32
    return %arg0, %c0_i32 : i32, i32
  }
  func.func @transform_2(%arg0: i32, %arg1: i32) -> (i32, i32) {
    %c0_i32 = arith.constant 0 : i32
    %c0_i32_0 = arith.constant 0 : i32
    return %arg1, %c0_i32 : i32, i32
  }
  func.func @transform_3(%arg0: i32, %arg1: i32) -> (i32, i32) {
    %c0_i32 = arith.constant 0 : i32
    %c0_i32_0 = arith.constant 0 : i32
    return %c0_i32, %arg1 : i32, i32
  }
  func.func @transform_4(%arg0: i32, %arg1: i32) -> (i32, i32) {
    %c0_i32 = arith.constant 0 : i32
    %c0_i32_0 = arith.constant 0 : i32
    return %arg0, %c0_i32 : i32, i32
  }
  func.func @transform_5(%arg0: i32, %arg1: i32) -> (i32, i32) {
    %c0_i32 = arith.constant 0 : i32
    %c0_i32_0 = arith.constant 0 : i32
    return %arg0, %c0_i32 : i32, i32
  }
}

</mosaic_0001>

<llo_original>
// kernel: tpu_custom_call.1
$region0: #{tpu_custom_call.1}
  #allocation0 [shape = 'u32[]', space=smem, size = 0x4, offset = 0x4, fixed_abs, tag = 'smem constant byte address 0x4 - core index']
  #allocation1 [shape = 'u32[72,128]{1,0:T(1,128)}', space=vmem, size = 0x9000, scoped, tag = 'internal scratch']
  #allocation2 [shape = 'f32[128,1]{1,0:T(8,128)}', space=vmem, size = 0x10000, scoped, tag = 'scratch operand']
  #allocation3 [shape = 'f32[128,1]{1,0:T(8,128)}', space=vmem, size = 0x10000, scoped, tag = 'scratch operand']
  #allocation4 [shape = 'f32[128,1]{1,0:T(8,128)}', space=vmem, size = 0x10000, scoped, tag = 'scratch operand']
  #allocation5 [shape = 'f32[128,1]{1,0:T(8,128)}', space=vmem, size = 0x10000, scoped, tag = 'scratch operand']
  %s0 = inlined_call_operand.vmem [shape: bf16[256,128], index: 0, kind: input, shape index: {}]
  %s1 = inlined_call_operand.vmem [shape: s32[256,1], index: 1, kind: input, shape index: {}]
  %s2 = inlined_call_operand.vmem [shape: bf16[256,128], index: 2, kind: input, shape index: {}]
  %s3 = inlined_call_operand.vmem [shape: s32[1,256], index: 3, kind: input, shape index: {}]
  %s4 = inlined_call_operand.vmem [shape: f32[256,1], index: 4, kind: output, shape index: {0}]
  %s5 = inlined_call_operand.vmem [shape: f32[256,1], index: 5, kind: output, shape index: {1}]
  %6 = xla_tuple %s4, %s5
  %s7 = sld [smem:[#allocation0]]
  $region65: #{tpu_custom_call.1} parent=0
    _
  %s9 = ssub.s32 1, %s7
  %s10 = scalar_select 0, %s9, %s7
  loop: start=0, step=1, limit=4
  $region2: #{tpu_custom_call.1} parent=0 // loop_pre_header
    _
  $region3: #{tpu_custom_call.1} parent=0 // loop_header
    %s12 = sphi 0, %s16
    %p13 = scmp.ge.s32.totalorder %s12, 4
    %s19 = sphi 0, %s31
    %s20 = sphi 0, %s27
    %s21 = sphi 0, %s19
    %s22 = sphi 0, %s20
    %s23 = sphi 0, %s21
    %s24 = sphi 0, %s22
    %s34 = sphi 0, %s36
    %s37 = sphi 0, %s34
    %s38 = sphi 0, %s37
    %s54 = sphi 0, %s38
    %s60 = sphi 0, %s62
    %s63 = sphi 0, %s60
    %s64 = sphi 0, %s63
    %s80 = sphi 0, %s64
    %s86 = sphi 0, %s88
    %s89 = sphi 0, %s86
    %s90 = sphi 0, %s89
    %s106 = sphi 0, %s90
    %s112 = sphi 0, %s114
    %s115 = sphi 0, %s112
    %s116 = sphi 0, %s115
    %s132 = sphi 0, %s116
    %s138 = sphi 0, %s140
    %s141 = sphi 0, %s138
    %s142 = sphi 0, %s141
    %s158 = sphi 0, %s142
    %s164 = sphi 0, %s166
    %s167 = sphi 0, %s164
    %s168 = sphi 0, %s167
    %s184 = sphi 0, %s168
  $region4: #{tpu_custom_call.1} parent=0 // loop_header_branch
    %15 = sbr.rel (%p13) target = $region8
  $region5: #{tpu_custom_call.1} parent=0 // loop_body
    %s17 = ssub.s32 %s12, 1
    %s18 = ssub.s32 %s12, 2
    %s25 = sadd.s32 1, %s20
    %p26 = scmp.ge.s32.totalorder %s25, 1
    %s27 = scalar_select %p26, 0, %s25
    %s28 = sadd.s32 1, %s19
    %s29 = scalar_select %p26, %s28, %s19
    %p30 = scmp.ge.s32.totalorder %s29, 2
    %s31 = scalar_select %p30, 0, %s29
    %s32 = ssub.s32 %s19, %s31
    %p33 = scmp.eq.s32.totalorder %s32, 0
    %s35 = sadd.s32 %s34, 1
    %s36 = scalar_select %p33, %s34, %s35
    %p39 = pneg %p33
    %p40 = scmp.eq.s32.totalorder %s12, 1
    %p41 = por %p39, %p40
    %p42 = scmp.ne.s32.totalorder %s34, %s37
    %p43 = scmp.eq.s32.totalorder %s12, 0
    %p44 = por %p42, %p43
    %p45 = scmp.ne.s32.totalorder %s34, %s37
    %p46 = scmp.eq.s32.totalorder %s17, 1
    %p47 = por %p45, %p46
    %p48 = scmp.ne.s32.totalorder %s37, %s38
    %p49 = scmp.eq.s32.totalorder %s17, 0
    %p50 = por %p48, %p49
    %p51 = scmp.ne.s32.totalorder %s37, %s38
    %p52 = scmp.eq.s32.totalorder %s18, 1
    %p53 = por %p51, %p52
    %p55 = scmp.ne.s32.totalorder %s38, %s54
    %p56 = scmp.eq.s32.totalorder %s18, 0
    %p57 = por %p55, %p56
    %s58 = ssub.s32 %s19, %s31
    %p59 = scmp.eq.s32.totalorder %s58, 0
    %s61 = sadd.s32 %s60, 1
    %s62 = scalar_select %p59, %s60, %s61
    %p65 = pneg %p59
    %p66 = scmp.eq.s32.totalorder %s12, 1
    %p67 = por %p65, %p66
    %p68 = scmp.ne.s32.totalorder %s60, %s63
    %p69 = scmp.eq.s32.totalorder %s12, 0
    %p70 = por %p68, %p69
    %p71 = scmp.ne.s32.totalorder %s60, %s63
    %p72 = scmp.eq.s32.totalorder %s17, 1
    %p73 = por %p71, %p72
    %p74 = scmp.ne.s32.totalorder %s63, %s64
    %p75 = scmp.eq.s32.totalorder %s17, 0
    %p76 = por %p74, %p75
    %p77 = scmp.ne.s32.totalorder %s63, %s64
    %p78 = scmp.eq.s32.totalorder %s18, 1
    %p79 = por %p77, %p78
    %p81 = scmp.ne.s32.totalorder %s64, %s80
    %p82 = scmp.eq.s32.totalorder %s18, 0
    %p83 = por %p81, %p82
    %s84 = ssub.s32 %s20, %s27
    %p85 = scmp.eq.s32.totalorder %s84, 0
    %s87 = sadd.s32 %s86, 1
    %s88 = scalar_select %p85, %s86, %s87
    %p91 = pneg %p85
    %p92 = scmp.eq.s32.totalorder %s12, 1
    %p93 = por %p91, %p92
    %p94 = scmp.ne.s32.totalorder %s86, %s89
    %p95 = scmp.eq.s32.totalorder %s12, 0
    %p96 = por %p94, %p95
    %p97 = scmp.ne.s32.totalorder %s86, %s89
    %p98 = scmp.eq.s32.totalorder %s17, 1
    %p99 = por %p97, %p98
    %p100 = scmp.ne.s32.totalorder %s89, %s90
    %p101 = scmp.eq.s32.totalorder %s17, 0
    %p102 = por %p100, %p101
    %p103 = scmp.ne.s32.totalorder %s89, %s90
    %p104 = scmp.eq.s32.totalorder %s18, 1
    %p105 = por %p103, %p104
    %p107 = scmp.ne.s32.totalorder %s90, %s106
    %p108 = scmp.eq.s32.totalorder %s18, 0
    %p109 = por %p107, %p108
    %s110 = ssub.s32 %s20, %s27
    %p111 = scmp.eq.s32.totalorder %s110, 0
    %s113 = sadd.s32 %s112, 1
    %s114 = scalar_select %p111, %s112, %s113
    %p117 = pneg %p111
    %p118 = scmp.eq.s32.totalorder %s12, 1
    %p119 = por %p117, %p118
    %p120 = scmp.ne.s32.totalorder %s112, %s115
    %p121 = scmp.eq.s32.totalorder %s12, 0
    %p122 = por %p120, %p121
    %p123 = scmp.ne.s32.totalorder %s112, %s115
    %p124 = scmp.eq.s32.totalorder %s17, 1
    %p125 = por %p123, %p124
    %p126 = scmp.ne.s32.totalorder %s115, %s116
    %p127 = scmp.eq.s32.totalorder %s17, 0
    %p128 = por %p126, %p127
    %p129 = scmp.ne.s32.totalorder %s115, %s116
    %p130 = scmp.eq.s32.totalorder %s18, 1
    %p131 = por %p129, %p130
    %p133 = scmp.ne.s32.totalorder %s116, %s132
    %p134 = scmp.eq.s32.totalorder %s18, 0
    %p135 = por %p133, %p134
    %s136 = ssub.s32 %s19, %s31
    %p137 = scmp.eq.s32.totalorder %s136, 0
    %s139 = sadd.s32 %s138, 1
    %s140 = scalar_select %p137, %s138, %s139
    %p143 = pneg %p137
    %p144 = scmp.eq.s32.totalorder %s12, 1
    %p145 = por %p143, %p144
    %p146 = scmp.ne.s32.totalorder %s138, %s141
    %p147 = scmp.eq.s32.totalorder %s12, 0
    %p148 = por %p146, %p147
    %p149 = scmp.ne.s32.totalorder %s138, %s141
    %p150 = scmp.eq.s32.totalorder %s17, 1
    %p151 = por %p149, %p150
    %p152 = scmp.ne.s32.totalorder %s141, %s142
    %p153 = scmp.eq.s32.totalorder %s17, 0
    %p154 = por %p152, %p153
    %p155 = scmp.ne.s32.totalorder %s141, %s142
    %p156 = scmp.eq.s32.totalorder %s18, 1
    %p157 = por %p155, %p156
    %p159 = scmp.ne.s32.totalorder %s142, %s158
    %p160 = scmp.eq.s32.totalorder %s18, 0
    %p161 = por %p159, %p160
    %s162 = ssub.s32 %s19, %s31
    %p163 = scmp.eq.s32.totalorder %s162, 0
    %s165 = sadd.s32 %s164, 1
    %s166 = scalar_select %p163, %s164, %s165
    %p169 = pneg %p163
    %p170 = scmp.eq.s32.totalorder %s12, 1
    %p171 = por %p169, %p170
    %p172 = scmp.ne.s32.totalorder %s164, %s167
    %p173 = scmp.eq.s32.totalorder %s12, 0
    %p174 = por %p172, %p173
    %p175 = scmp.ne.s32.totalorder %s164, %s167
    %p176 = scmp.eq.s32.totalorder %s17, 1
    %p177 = por %p175, %p176
    %p178 = scmp.ne.s32.totalorder %s167, %s168
    %p179 = scmp.eq.s32.totalorder %s17, 0
    %p180 = por %p178, %p179
    %p181 = scmp.ne.s32.totalorder %s167, %s168
    %p182 = scmp.eq.s32.totalorder %s18, 1
    %p183 = por %p181, %p182
    %p185 = scmp.ne.s32.totalorder %s168, %s184
    %p186 = scmp.eq.s32.totalorder %s18, 0
    %p187 = por %p185, %p186
    %p188 = scmp.le.s32.totalorder 1, %s12
    %p189 = scmp.lt.s32.totalorder %s12, 3
    %p190 = pnand %p188, %p189
    %p191 = pneg %p190
    // Predicated region
    $region9: #{tpu_custom_call.1} parent=5 // pred_check
      _
    $region10: #{tpu_custom_call.1} parent=5 // pred_check_branch
      %193 = sbr.rel (%p190) target = $region12
    $region11: #{tpu_custom_call.1} parent=5 // pred_region
      %s194 = ssub.s32 %s12, 1
      // Predicated region
      $region13: #{tpu_custom_call.1} parent=11 // pred_check
        %p195 = pneg %p102
      $region14: #{tpu_custom_call.1} parent=11 // pred_check_branch
        %197 = sbr.rel (%p195) target = $region16
      $region15: #{tpu_custom_call.1} parent=11 // pred_region
        %s198 = smul.u32 32, %s22
        %p199 = scmp.lt.s32.totalorder %s198, 31
        %s200 = scalar_select %p199, %s198, 31
        %s201 = smul.addr %s200, 4
        %s202 = scalar_lea.vmem %s2, %s201
        %s203 = smul.u32 32, %s22
      $region16: #{tpu_custom_call.1} parent=11 // pred_fallthru
        _
      // Predicated region
      $region17: #{tpu_custom_call.1} parent=11 // pred_check
        %p204 = pneg %p128
      $region18: #{tpu_custom_call.1} parent=11 // pred_check_branch
        %206 = sbr.rel (%p204) target = $region20
      $region19: #{tpu_custom_call.1} parent=11 // pred_region
        %s207 = smul.u32 2, %s22
        %p208 = scmp.lt.s32.totalorder %s207, 1
        %s209 = scalar_select %p208, %s207, 1
        %s210 = scalar_lea.vmem %s3, %s209
        %s211 = smul.u32 2, %s22
      $region20: #{tpu_custom_call.1} parent=11 // pred_fallthru
        _
    $region12: #{tpu_custom_call.1} parent=5 // pred_fallthru
      _
    %p212 = scmp.lt.s32.totalorder %s12, 2
    // Predicated region
    $region21: #{tpu_custom_call.1} parent=5 // pred_check
      %p213 = pneg %p212
    $region22: #{tpu_custom_call.1} parent=5 // pred_check_branch
      %215 = sbr.rel (%p213) target = $region24
    $region23: #{tpu_custom_call.1} parent=5 // pred_region
      // Predicated region
      $region25: #{tpu_custom_call.1} parent=23 // pred_check
        %p216 = pneg %p44
      $region26: #{tpu_custom_call.1} parent=23 // pred_check_branch
        %218 = sbr.rel (%p216) target = $region28
      $region27: #{tpu_custom_call.1} parent=23 // pred_region
        %s219 = smul.u32 16, %s19
        %p220 = scmp.lt.s32.totalorder %s219, 31
        %s221 = scalar_select %p220, %s219, 31
        %s222 = smul.addr %s221, 4
        %s223 = scalar_lea.vmem %s0, %s222
        %s224 = smul.u32 16, %s19
      $region28: #{tpu_custom_call.1} parent=23 // pred_fallthru
        _
      // Predicated region
      $region29: #{tpu_custom_call.1} parent=23 // pred_check
        %p225 = pneg %p70
      $region30: #{tpu_custom_call.1} parent=23 // pred_check_branch
        %227 = sbr.rel (%p225) target = $region32
      $region31: #{tpu_custom_call.1} parent=23 // pred_region
        %s228 = smul.u32 16, %s19
        %p229 = scmp.lt.s32.totalorder %s228, 31
        %s230 = scalar_select %p229, %s228, 31
        %s231 = smul.addr %s230, 8
        %s232 = scalar_lea.vmem %s1, %s231
        %s233 = smul.u32 16, %s19
      $region32: #{tpu_custom_call.1} parent=23 // pred_fallthru
        _
    $region24: #{tpu_custom_call.1} parent=5 // pred_fallthru
      _
    %p234 = scmp.le.s32.totalorder 1, %s12
    %p235 = scmp.lt.s32.totalorder %s12, 3
    %p236 = pnand %p234, %p235
    %p237 = pneg %p236
    // Predicated region
    $region33: #{tpu_custom_call.1} parent=5 // pred_check
      _
    $region34: #{tpu_custom_call.1} parent=5 // pred_check_branch
      %239 = sbr.rel (%p236) target = $region36
    $region35: #{tpu_custom_call.1} parent=5 // pred_region
      %s240 = ssub.s32 %s12, 1
      %s241 = smul.u32 16, %s21
      %p242 = scmp.lt.s32.totalorder %s241, 31
      %s243 = scalar_select %p242, %s241, 31
      %s244 = smul.addr %s243, 4
      %s245 = scalar_lea.vmem %s0, %s244
      %p246 = pneg %p50
      %p247 = pneg %p47
      %s248 = smul.u32 16, %s21
      %p249 = scmp.lt.s32.totalorder %s248, 31
      %s250 = scalar_select %p249, %s248, 31
      %s251 = smul.addr %s250, 8
      %s252 = scalar_lea.vmem %s1, %s251
      %p253 = pneg %p76
      %p254 = pneg %p73
      %s255 = smul.u32 32, %s22
      %p256 = scmp.lt.s32.totalorder %s255, 31
      %s257 = scalar_select %p256, %s255, 31
      %s258 = smul.addr %s257, 4
      %s259 = scalar_lea.vmem %s2, %s258
      %p260 = pneg %p102
      %p261 = pneg %p99
      %s262 = smul.u32 2, %s22
      %p263 = scmp.lt.s32.totalorder %s262, 1
      %s264 = scalar_select %p263, %s262, 1
      %s265 = scalar_lea.vmem %s3, %s264
      %p266 = pneg %p128
      %p267 = pneg %p125
      %p268 = pneg %p154
      %p269 = pneg %p151
      %s270 = smul.u32 16, %s21
      %p271 = scmp.lt.s32.totalorder %s270, 31
      %s272 = scalar_select %p271, %s270, 31
      %s273 = smul.addr %s272, 8
      %s274 = scalar_lea.vmem %s4, %s273
      %p275 = pneg %p180
      %p276 = pneg %p177
      %s277 = smul.u32 16, %s21
      %p278 = scmp.lt.s32.totalorder %s277, 31
      %s279 = scalar_select %p278, %s277, 31
      %s280 = smul.addr %s279, 8
      %s281 = scalar_lea.vmem %s5, %s280
      %s282 = smul.u32 16, %s21
      %p283 = scmp.lt.s32.totalorder %s282, 31
      %s284 = scalar_select %p283, %s282, 31
      %s285 = smul.addr %s284, 4
      %s286 = scalar_lea.vmem %s0, %s285
      %s287 = smul.u32 16, %s21
      %s288 = smul.u32 16, %s21
      %p289 = scmp.lt.s32.totalorder %s288, 31
      %s290 = scalar_select %p289, %s288, 31
      %s291 = smul.addr %s290, 8
      %s292 = scalar_lea.vmem %s1, %s291
      %s293 = smul.u32 16, %s21
      %s294 = smul.u32 32, %s22
      %p295 = scmp.lt.s32.totalorder %s294, 31
      %s296 = scalar_select %p295, %s294, 31
      %s297 = smul.addr %s296, 4
      %s298 = scalar_lea.vmem %s2, %s297
      %s299 = smul.u32 32, %s22
      %s300 = smul.u32 2, %s22
      %p301 = scmp.lt.s32.totalorder %s300, 1
      %s302 = scalar_select %p301, %s300, 1
      %s303 = scalar_lea.vmem %s3, %s302
      %s304 = smul.u32 2, %s22
      %s305 = smul.u32 16, %s21
      %p306 = scmp.lt.s32.totalorder %s305, 31
      %s307 = scalar_select %p306, %s305, 31
      %s308 = smul.addr %s307, 8
      %s309 = scalar_lea.vmem %s4, %s308
      %s310 = smul.u32 16, %s21
      %s311 = smul.u32 16, %s21
      %p312 = scmp.lt.s32.totalorder %s311, 31
      %s313 = scalar_select %p312, %s311, 31
      %s314 = smul.addr %s313, 8
      %s315 = scalar_lea.vmem %s5, %s314
      %s316 = smul.u32 16, %s21
      %p317 = scmp.eq.s32.totalorder %s22, 0
      // Predicated region
      $region37: #{tpu_custom_call.1} parent=35 // pred_check
        %p318 = pneg %p317
      $region38: #{tpu_custom_call.1} parent=35 // pred_check_branch
        %320 = sbr.rel (%p318) target = $region40
      $region39: #{tpu_custom_call.1} parent=35 // pred_region
        %vm321 = vcmask 7168
        %322 = vst.msk [vmem:[#allocation2] sm:$0xff] %vm321, -inf
        %323 = vst.msk [vmem:[#allocation2 + $0x8] sm:$0xff] %vm321, -inf
        %324 = vst.msk [vmem:[#allocation2 + $0x10] sm:$0xff] %vm321, -inf
        %325 = vst.msk [vmem:[#allocation2 + $0x18] sm:$0xff] %vm321, -inf
        %326 = vst.msk [vmem:[#allocation2 + $0x20] sm:$0xff] %vm321, -inf
        %327 = vst.msk [vmem:[#allocation2 + $0x28] sm:$0xff] %vm321, -inf
        %328 = vst.msk [vmem:[#allocation2 + $0x30] sm:$0xff] %vm321, -inf
        %329 = vst.msk [vmem:[#allocation2 + $0x38] sm:$0xff] %vm321, -inf
        %330 = vst.msk [vmem:[#allocation2 + $0x40] sm:$0xff] %vm321, -inf
        %331 = vst.msk [vmem:[#allocation2 + $0x48] sm:$0xff] %vm321, -inf
        %332 = vst.msk [vmem:[#allocation2 + $0x50] sm:$0xff] %vm321, -inf
        %333 = vst.msk [vmem:[#allocation2 + $0x58] sm:$0xff] %vm321, -inf
        %334 = vst.msk [vmem:[#allocation2 + $0x60] sm:$0xff] %vm321, -inf
        %335 = vst.msk [vmem:[#allocation2 + $0x68] sm:$0xff] %vm321, -inf
        %336 = vst.msk [vmem:[#allocation2 + $0x70] sm:$0xff] %vm321, -inf
        %337 = vst.msk [vmem:[#allocation2 + $0x78] sm:$0xff] %vm321, -inf
        %338 = vst.msk [vmem:[#allocation3] sm:$0xff] %vm321, 0.0
        %339 = vst.msk [vmem:[#allocation3 + $0x8] sm:$0xff] %vm321, 0.0
        %340 = vst.msk [vmem:[#allocation3 + $0x10] sm:$0xff] %vm321, 0.0
        %341 = vst.msk [vmem:[#allocation3 + $0x18] sm:$0xff] %vm321, 0.0
        %342 = vst.msk [vmem:[#allocation3 + $0x20] sm:$0xff] %vm321, 0.0
        %343 = vst.msk [vmem:[#allocation3 + $0x28] sm:$0xff] %vm321, 0.0
        %344 = vst.msk [vmem:[#allocation3 + $0x30] sm:$0xff] %vm321, 0.0
        %345 = vst.msk [vmem:[#allocation3 + $0x38] sm:$0xff] %vm321, 0.0
        %346 = vst.msk [vmem:[#allocation3 + $0x40] sm:$0xff] %vm321, 0.0
        %347 = vst.msk [vmem:[#allocation3 + $0x48] sm:$0xff] %vm321, 0.0
        %348 = vst.msk [vmem:[#allocation3 + $0x50] sm:$0xff] %vm321, 0.0
        %349 = vst.msk [vmem:[#allocation3 + $0x58] sm:$0xff] %vm321, 0.0
        %350 = vst.msk [vmem:[#allocation3 + $0x60] sm:$0xff] %vm321, 0.0
        %351 = vst.msk [vmem:[#allocation3 + $0x68] sm:$0xff] %vm321, 0.0
        %352 = vst.msk [vmem:[#allocation3 + $0x70] sm:$0xff] %vm321, 0.0
        %353 = vst.msk [vmem:[#allocation3 + $0x78] sm:$0xff] %vm321, 0.0
        %354 = vst.msk [vmem:[#allocation4] sm:$0xff] %vm321, 0.0
        %355 = vst.msk [vmem:[#allocation4 + $0x8] sm:$0xff] %vm321, 0.0
        %356 = vst.msk [vmem:[#allocation4 + $0x10] sm:$0xff] %vm321, 0.0
        %357 = vst.msk [vmem:[#allocation4 + $0x18] sm:$0xff] %vm321, 0.0
        %358 = vst.msk [vmem:[#allocation4 + $0x20] sm:$0xff] %vm321, 0.0
        %359 = vst.msk [vmem:[#allocation4 + $0x28] sm:$0xff] %vm321, 0.0
        %360 = vst.msk [vmem:[#allocation4 + $0x30] sm:$0xff] %vm321, 0.0
        %361 = vst.msk [vmem:[#allocation4 + $0x38] sm:$0xff] %vm321, 0.0
        %362 = vst.msk [vmem:[#allocation4 + $0x40] sm:$0xff] %vm321, 0.0
        %363 = vst.msk [vmem:[#allocation4 + $0x48] sm:$0xff] %vm321, 0.0
        %364 = vst.msk [vmem:[#allocation4 + $0x50] sm:$0xff] %vm321, 0.0
        %365 = vst.msk [vmem:[#allocation4 + $0x58] sm:$0xff] %vm321, 0.0
        %366 = vst.msk [vmem:[#allocation4 + $0x60] sm:$0xff] %vm321, 0.0
        %367 = vst.msk [vmem:[#allocation4 + $0x68] sm:$0xff] %vm321, 0.0
        %368 = vst.msk [vmem:[#allocation4 + $0x70] sm:$0xff] %vm321, 0.0
        %369 = vst.msk [vmem:[#allocation4 + $0x78] sm:$0xff] %vm321, 0.0
        %370 = vst.msk [vmem:[#allocation5] sm:$0xff] %vm321, 0.0
        %371 = vst.msk [vmem:[#allocation5 + $0x8] sm:$0xff] %vm321, 0.0
        %372 = vst.msk [vmem:[#allocation5 + $0x10] sm:$0xff] %vm321, 0.0
        %373 = vst.msk [vmem:[#allocation5 + $0x18] sm:$0xff] %vm321, 0.0
        %374 = vst.msk [vmem:[#allocation5 + $0x20] sm:$0xff] %vm321, 0.0
        %375 = vst.msk [vmem:[#allocation5 + $0x28] sm:$0xff] %vm321, 0.0
        %376 = vst.msk [vmem:[#allocation5 + $0x30] sm:$0xff] %vm321, 0.0
        %377 = vst.msk [vmem:[#allocation5 + $0x38] sm:$0xff] %vm321, 0.0
        %378 = vst.msk [vmem:[#allocation5 + $0x40] sm:$0xff] %vm321, 0.0
        %379 = vst.msk [vmem:[#allocation5 + $0x48] sm:$0xff] %vm321, 0.0
        %380 = vst.msk [vmem:[#allocation5 + $0x50] sm:$0xff] %vm321, 0.0
        %381 = vst.msk [vmem:[#allocation5 + $0x58] sm:$0xff] %vm321, 0.0
        %382 = vst.msk [vmem:[#allocation5 + $0x60] sm:$0xff] %vm321, 0.0
        %383 = vst.msk [vmem:[#allocation5 + $0x68] sm:$0xff] %vm321, 0.0
        %384 = vst.msk [vmem:[#allocation5 + $0x70] sm:$0xff] %vm321, 0.0
        %385 = vst.msk [vmem:[#allocation5 + $0x78] sm:$0xff] %vm321, 0.0
      $region40: #{tpu_custom_call.1} parent=35 // pred_fallthru
        _
      %v386 = vld [vmem:[%s286] sm:$0xf]
      %v387 = vld [vmem:[%s286 + $0x4] sm:$0xf]
      %v388 = vld [vmem:[%s286 + $0x8] sm:$0xf]
      %v389 = vld [vmem:[%s286 + $0xc] sm:$0xf]
      %v390 = vld [vmem:[%s286 + $0x10] sm:$0xf]
      %v391 = vld [vmem:[%s286 + $0x14] sm:$0xf]
      %v392 = vld [vmem:[%s286 + $0x18] sm:$0xf]
      %v393 = vld [vmem:[%s286 + $0x1c] sm:$0xf]
      %v394 = vld [vmem:[%s286 + $0x20] sm:$0xf]
      %v395 = vld [vmem:[%s286 + $0x24] sm:$0xf]
      %v396 = vld [vmem:[%s286 + $0x28] sm:$0xf]
      %v397 = vld [vmem:[%s286 + $0x2c] sm:$0xf]
      %v398 = vld [vmem:[%s286 + $0x30] sm:$0xf]
      %v399 = vld [vmem:[%s286 + $0x34] sm:$0xf]
      %v400 = vld [vmem:[%s286 + $0x38] sm:$0xf]
      %v401 = vld [vmem:[%s286 + $0x3c] sm:$0xf]
      %v402 = vld [vmem:[%s298] sm:$0xf]
      %v403 = vld [vmem:[%s298 + $0x4] sm:$0xf]
      %v404 = vld [vmem:[%s298 + $0x8] sm:$0xf]
      %v405 = vld [vmem:[%s298 + $0xc] sm:$0xf]
      %v406 = vld [vmem:[%s298 + $0x10] sm:$0xf]
      %v407 = vld [vmem:[%s298 + $0x14] sm:$0xf]
      %v408 = vld [vmem:[%s298 + $0x18] sm:$0xf]
      %v409 = vld [vmem:[%s298 + $0x1c] sm:$0xf]
      %v410 = vld [vmem:[%s298 + $0x20] sm:$0xf]
      %v411 = vld [vmem:[%s298 + $0x24] sm:$0xf]
      %v412 = vld [vmem:[%s298 + $0x28] sm:$0xf]
      %v413 = vld [vmem:[%s298 + $0x2c] sm:$0xf]
      %v414 = vld [vmem:[%s298 + $0x30] sm:$0xf]
      %v415 = vld [vmem:[%s298 + $0x34] sm:$0xf]
      %v416 = vld [vmem:[%s298 + $0x38] sm:$0xf]
      %v417 = vld [vmem:[%s298 + $0x3c] sm:$0xf]
      %v418 = vld [vmem:[%s298 + $0x40] sm:$0xf]
      %v419 = vld [vmem:[%s298 + $0x44] sm:$0xf]
      %v420 = vld [vmem:[%s298 + $0x48] sm:$0xf]
      %v421 = vld [vmem:[%s298 + $0x4c] sm:$0xf]
      %v422 = vld [vmem:[%s298 + $0x50] sm:$0xf]
      %v423 = vld [vmem:[%s298 + $0x54] sm:$0xf]
      %v424 = vld [vmem:[%s298 + $0x58] sm:$0xf]
      %v425 = vld [vmem:[%s298 + $0x5c] sm:$0xf]
      %v426 = vld [vmem:[%s298 + $0x60] sm:$0xf]
      %v427 = vld [vmem:[%s298 + $0x64] sm:$0xf]
      %v428 = vld [vmem:[%s298 + $0x68] sm:$0xf]
      %v429 = vld [vmem:[%s298 + $0x6c] sm:$0xf]
      %v430 = vld [vmem:[%s298 + $0x70] sm:$0xf]
      %v431 = vld [vmem:[%s298 + $0x74] sm:$0xf]
      %v432 = vld [vmem:[%s298 + $0x78] sm:$0xf]
      %v433 = vld [vmem:[%s298 + $0x7c] sm:$0xf]
      %v450 = vunpack.c.l.b16 %v386
      %v451 = vunpack.c.l.b16 %v387
      %v452 = vunpack.c.l.b16 %v388
      %v453 = vunpack.c.l.b16 %v389
      %v454 = vunpack.c.l.b16 %v390
      %v455 = vunpack.c.l.b16 %v391
      %v456 = vunpack.c.l.b16 %v392
      %v457 = vunpack.c.l.b16 %v393
      %v458 = vunpack.c.l.b16 %v394
      %v459 = vunpack.c.l.b16 %v395
      %v460 = vunpack.c.l.b16 %v396
      %v461 = vunpack.c.l.b16 %v397
      %v462 = vunpack.c.l.b16 %v398
      %v463 = vunpack.c.l.b16 %v399
      %v464 = vunpack.c.l.b16 %v400
      %v465 = vunpack.c.l.b16 %v401
      %v466 = vpack.c.b16 %v451, %v450
      %v467 = vpack.c.b16 %v453, %v452
      %v468 = vpack.c.b16 %v455, %v454
      %v469 = vpack.c.b16 %v457, %v456
      %v470 = vpack.c.b16 %v459, %v458
      %v471 = vpack.c.b16 %v461, %v460
      %v472 = vpack.c.b16 %v463, %v462
      %v473 = vpack.c.b16 %v465, %v464
      %v514 = vunpack.c.l.b16 %v402
      %v515 = vunpack.c.l.b16 %v403
      %v516 = vunpack.c.l.b16 %v404
      %v517 = vunpack.c.l.b16 %v405
      %v518 = vunpack.c.l.b16 %v406
      %v519 = vunpack.c.l.b16 %v407
      %v520 = vunpack.c.l.b16 %v408
      %v521 = vunpack.c.l.b16 %v409
      %v522 = vunpack.c.l.b16 %v410
      %v523 = vunpack.c.l.b16 %v411
      %v524 = vunpack.c.l.b16 %v412
      %v525 = vunpack.c.l.b16 %v413
      %v526 = vunpack.c.l.b16 %v414
      %v527 = vunpack.c.l.b16 %v415
      %v528 = vunpack.c.l.b16 %v416
      %v529 = vunpack.c.l.b16 %v417
      %v530 = vunpack.c.l.b16 %v418
      %v531 = vunpack.c.l.b16 %v419
      %v532 = vunpack.c.l.b16 %v420
      %v533 = vunpack.c.l.b16 %v421
      %v534 = vunpack.c.l.b16 %v422
      %v535 = vunpack.c.l.b16 %v423
      %v536 = vunpack.c.l.b16 %v424
      %v537 = vunpack.c.l.b16 %v425
      %v538 = vunpack.c.l.b16 %v426
      %v539 = vunpack.c.l.b16 %v427
      %v540 = vunpack.c.l.b16 %v428
      %v541 = vunpack.c.l.b16 %v429
      %v542 = vunpack.c.l.b16 %v430
      %v543 = vunpack.c.l.b16 %v431
      %v544 = vunpack.c.l.b16 %v432
      %v545 = vunpack.c.l.b16 %v433
      %v546 = vpack.c.b16 %v515, %v514
      %v547 = vpack.c.b16 %v517, %v516
      %v548 = vpack.c.b16 %v519, %v518
      %v549 = vpack.c.b16 %v521, %v520
      %v550 = vpack.c.b16 %v523, %v522
      %v551 = vpack.c.b16 %v525, %v524
      %v552 = vpack.c.b16 %v527, %v526
      %v553 = vpack.c.b16 %v529, %v528
      %v554 = vpack.c.b16 %v531, %v530
      %v555 = vpack.c.b16 %v533, %v532
      %v556 = vpack.c.b16 %v535, %v534
      %v557 = vpack.c.b16 %v537, %v536
      %v558 = vpack.c.b16 %v539, %v538
      %v559 = vpack.c.b16 %v541, %v540
      %v560 = vpack.c.b16 %v543, %v542
      %v561 = vpack.c.b16 %v545, %v544
      %578 = vmatpush.bf16.xpose.msra.mxu0 %v553
      %579 = vmatpush.bf16.xpose.msra.mxu0 %v552
      %580 = vmatpush.bf16.xpose.msra.mxu0 %v551
      %581 = vmatpush.bf16.xpose.msra.mxu0 %v550
      %582 = vmatpush.bf16.xpose.msra.mxu0 %v549
      %583 = vmatpush.bf16.xpose.msra.mxu0 %v548
      %584 = vmatpush.bf16.xpose.msra.mxu0 %v547
      %585 = vmatpush.bf16.xpose.msra.mxu0 %v546
      %586 = vmatmul.bf16.gmra.mxu0 %v466
      %v587 = vpop.f32.mrf.mxu0
      %v588 = vadd.f32 0.0, %v587
      %v589 = vpop.f32.mrf.mxu0
      %v590 = vadd.f32 0.0, %v589
      %591 = vmatmul.bf16.gmra.mxu0 %v467
      %v592 = vpop.f32.mrf.mxu0
      %v593 = vadd.f32 0.0, %v592
      %v594 = vpop.f32.mrf.mxu0
      %v595 = vadd.f32 0.0, %v594
      %596 = vmatmul.bf16.gmra.mxu0 %v468
      %v597 = vpop.f32.mrf.mxu0
      %v598 = vadd.f32 0.0, %v597
      %v599 = vpop.f32.mrf.mxu0
      %v600 = vadd.f32 0.0, %v599
      %601 = vmatmul.bf16.gmra.mxu0 %v469
      %v602 = vpop.f32.mrf.mxu0
      %v603 = vadd.f32 0.0, %v602
      %v604 = vpop.f32.mrf.mxu0
      %v605 = vadd.f32 0.0, %v604
      %606 = vmatmul.bf16.gmra.mxu0 %v470
      %v607 = vpop.f32.mrf.mxu0
      %v608 = vadd.f32 0.0, %v607
      %v609 = vpop.f32.mrf.mxu0
      %v610 = vadd.f32 0.0, %v609
      %611 = vmatmul.bf16.gmra.mxu0 %v471
      %v612 = vpop.f32.mrf.mxu0
      %v613 = vadd.f32 0.0, %v612
      %v614 = vpop.f32.mrf.mxu0
      %v615 = vadd.f32 0.0, %v614
      %616 = vmatmul.bf16.gmra.mxu0 %v472
      %v617 = vpop.f32.mrf.mxu0
      %v618 = vadd.f32 0.0, %v617
      %v619 = vpop.f32.mrf.mxu0
      %v620 = vadd.f32 0.0, %v619
      %621 = vmatmul.bf16.gmra.mxu0 %v473
      %v622 = vpop.f32.mrf.mxu0
      %v623 = vadd.f32 0.0, %v622
      %v624 = vpop.f32.mrf.mxu0
      %v625 = vadd.f32 0.0, %v624
      %626 = vdwg.mxu0
      %627 = vmatpush.bf16.xpose.msra.mxu0 %v561
      %628 = vmatpush.bf16.xpose.msra.mxu0 %v560
      %629 = vmatpush.bf16.xpose.msra.mxu0 %v559
      %630 = vmatpush.bf16.xpose.msra.mxu0 %v558
      %631 = vmatpush.bf16.xpose.msra.mxu0 %v557
      %632 = vmatpush.bf16.xpose.msra.mxu0 %v556
      %633 = vmatpush.bf16.xpose.msra.mxu0 %v555
      %634 = vmatpush.bf16.xpose.msra.mxu0 %v554
      %635 = vmatmul.bf16.gmra.mxu0 %v466
      %v636 = vpop.f32.mrf.mxu0
      %v637 = vadd.f32 0.0, %v636
      %v638 = vpop.f32.mrf.mxu0
      %v639 = vadd.f32 0.0, %v638
      %640 = vmatmul.bf16.gmra.mxu0 %v467
      %v641 = vpop.f32.mrf.mxu0
      %v642 = vadd.f32 0.0, %v641
      %v643 = vpop.f32.mrf.mxu0
      %v644 = vadd.f32 0.0, %v643
      %645 = vmatmul.bf16.gmra.mxu0 %v468
      %v646 = vpop.f32.mrf.mxu0
      %v647 = vadd.f32 0.0, %v646
      %v648 = vpop.f32.mrf.mxu0
      %v649 = vadd.f32 0.0, %v648
      %650 = vmatmul.bf16.gmra.mxu0 %v469
      %v651 = vpop.f32.mrf.mxu0
      %v652 = vadd.f32 0.0, %v651
      %v653 = vpop.f32.mrf.mxu0
      %v654 = vadd.f32 0.0, %v653
      %655 = vmatmul.bf16.gmra.mxu0 %v470
      %v656 = vpop.f32.mrf.mxu0
      %v657 = vadd.f32 0.0, %v656
      %v658 = vpop.f32.mrf.mxu0
      %v659 = vadd.f32 0.0, %v658
      %660 = vmatmul.bf16.gmra.mxu0 %v471
      %v661 = vpop.f32.mrf.mxu0
      %v662 = vadd.f32 0.0, %v661
      %v663 = vpop.f32.mrf.mxu0
      %v664 = vadd.f32 0.0, %v663
      %665 = vmatmul.bf16.gmra.mxu0 %v472
      %v666 = vpop.f32.mrf.mxu0
      %v667 = vadd.f32 0.0, %v666
      %v668 = vpop.f32.mrf.mxu0
      %v669 = vadd.f32 0.0, %v668
      %670 = vmatmul.bf16.gmra.mxu0 %v473
      %v671 = vpop.f32.mrf.mxu0
      %v672 = vadd.f32 0.0, %v671
      %v673 = vpop.f32.mrf.mxu0
      %v674 = vadd.f32 0.0, %v673
      %675 = vdwg.mxu0
      %s676 = smul.u32 %s21, 128
      %v677 = vlaneseq
      %v678 = vshrl.u32 %v677, 7
      %v679 = vadd.s32 %v678, 8
      %v680 = vadd.s32 %v678, 16
      %v681 = vadd.s32 %v678, 24
      %v682 = vadd.s32 %v678, 32
      %v683 = vadd.s32 %v678, 40
      %v684 = vadd.s32 %v678, 48
      %v685 = vadd.s32 %v678, 56
      %v686 = vadd.s32 %v678, 64
      %v687 = vadd.s32 %v678, 72
      %v688 = vadd.s32 %v678, 80
      %v689 = vadd.s32 %v678, 88
      %v690 = vadd.s32 %v678, 96
      %v691 = vadd.s32 %v678, 104
      %v692 = vadd.s32 %v678, 112
      %v693 = vadd.s32 %v678, 120
      %v694 = vstv %s676
      %v695 = vadd.s32 %v694, %v678
      %v696 = vadd.s32 %v694, %v679
      %v697 = vadd.s32 %v694, %v680
      %v698 = vadd.s32 %v694, %v681
      %v699 = vadd.s32 %v694, %v682
      %v700 = vadd.s32 %v694, %v683
      %v701 = vadd.s32 %v694, %v684
      %v702 = vadd.s32 %v694, %v685
      %v703 = vadd.s32 %v694, %v686
      %v704 = vadd.s32 %v694, %v687
      %v705 = vadd.s32 %v694, %v688
      %v706 = vadd.s32 %v694, %v689
      %v707 = vadd.s32 %v694, %v690
      %v708 = vadd.s32 %v694, %v691
      %v709 = vadd.s32 %v694, %v692
      %v710 = vadd.s32 %v694, %v693
      %s711 = smul.u32 %s22, 256
      %v712 = vlaneseq
      %v713 = vand.u32 %v712, 127
      %v714 = vadd.s32 %v713, 128
      %v715 = vstv %s711
      %v716 = vadd.s32 %v715, %v713
      %v717 = vadd.s32 %v715, %v714
      %vm718 = vcmp.ne.s32.totalorder %v695, %v716
      %vm719 = vcmp.ne.s32.totalorder %v695, %v717
      %vm720 = vcmp.ne.s32.totalorder %v696, %v716
      %vm721 = vcmp.ne.s32.totalorder %v696, %v717
      %vm722 = vcmp.ne.s32.totalorder %v697, %v716
      %vm723 = vcmp.ne.s32.totalorder %v697, %v717
      %vm724 = vcmp.ne.s32.totalorder %v698, %v716
      %vm725 = vcmp.ne.s32.totalorder %v698, %v717
      %vm726 = vcmp.ne.s32.totalorder %v699, %v716
      %vm727 = vcmp.ne.s32.totalorder %v699, %v717
      %vm728 = vcmp.ne.s32.totalorder %v700, %v716
      %vm729 = vcmp.ne.s32.totalorder %v700, %v717
      %vm730 = vcmp.ne.s32.totalorder %v701, %v716
      %vm731 = vcmp.ne.s32.totalorder %v701, %v717
      %vm732 = vcmp.ne.s32.totalorder %v702, %v716
      %vm733 = vcmp.ne.s32.totalorder %v702, %v717
      %vm734 = vcmp.ne.s32.totalorder %v703, %v716
      %vm735 = vcmp.ne.s32.totalorder %v703, %v717
      %vm736 = vcmp.ne.s32.totalorder %v704, %v716
      %vm737 = vcmp.ne.s32.totalorder %v704, %v717
      %vm738 = vcmp.ne.s32.totalorder %v705, %v716
      %vm739 = vcmp.ne.s32.totalorder %v705, %v717
      %vm740 = vcmp.ne.s32.totalorder %v706, %v716
      %vm741 = vcmp.ne.s32.totalorder %v706, %v717
      %vm742 = vcmp.ne.s32.totalorder %v707, %v716
      %vm743 = vcmp.ne.s32.totalorder %v707, %v717
      %vm744 = vcmp.ne.s32.totalorder %v708, %v716
      %vm745 = vcmp.ne.s32.totalorder %v708, %v717
      %vm746 = vcmp.ne.s32.totalorder %v709, %v716
      %vm747 = vcmp.ne.s32.totalorder %v709, %v717
      %vm748 = vcmp.ne.s32.totalorder %v710, %v716
      %vm749 = vcmp.ne.s32.totalorder %v710, %v717
      %vm750 = vcmp.lt.s32.totalorder %v716, 256
      %vm751 = vcmp.lt.s32.totalorder %v717, 256
      %v752 = vsel %vm750, 1, 0
      %v753 = vsel %vm751, 1, 0
      %vm754 = vcmp.eq.s32.totalorder %v752, 1
      %vm755 = vcmp.eq.s32.totalorder %v753, 1
      %vm756 = vmand %vm718, %vm754
      %vm757 = vmand %vm719, %vm755
      %vm758 = vmand %vm720, %vm754
      %vm759 = vmand %vm721, %vm755
      %vm760 = vmand %vm722, %vm754
      %vm761 = vmand %vm723, %vm755
      %vm762 = vmand %vm724, %vm754
      %vm763 = vmand %vm725, %vm755
      %vm764 = vmand %vm726, %vm754
      %vm765 = vmand %vm727, %vm755
      %vm766 = vmand %vm728, %vm754
      %vm767 = vmand %vm729, %vm755
      %vm768 = vmand %vm730, %vm754
      %vm769 = vmand %vm731, %vm755
      %vm770 = vmand %vm732, %vm754
      %vm771 = vmand %vm733, %vm755
      %vm772 = vmand %vm734, %vm754
      %vm773 = vmand %vm735, %vm755
      %vm774 = vmand %vm736, %vm754
      %vm775 = vmand %vm737, %vm755
      %vm776 = vmand %vm738, %vm754
      %vm777 = vmand %vm739, %vm755
      %vm778 = vmand %vm740, %vm754
      %vm779 = vmand %vm741, %vm755
      %vm780 = vmand %vm742, %vm754
      %vm781 = vmand %vm743, %vm755
      %vm782 = vmand %vm744, %vm754
      %vm783 = vmand %vm745, %vm755
      %vm784 = vmand %vm746, %vm754
      %vm785 = vmand %vm747, %vm755
      %vm786 = vmand %vm748, %vm754
      %vm787 = vmand %vm749, %vm755
      %v788 = vsel %vm756, %v588, -1e+09
      %v789 = vsel %vm757, %v637, -1e+09
      %v790 = vsel %vm758, %v590, -1e+09
      %v791 = vsel %vm759, %v639, -1e+09
      %v792 = vsel %vm760, %v593, -1e+09
      %v793 = vsel %vm761, %v642, -1e+09
      %v794 = vsel %vm762, %v595, -1e+09
      %v795 = vsel %vm763, %v644, -1e+09
      %v796 = vsel %vm764, %v598, -1e+09
      %v797 = vsel %vm765, %v647, -1e+09
      %v798 = vsel %vm766, %v600, -1e+09
      %v799 = vsel %vm767, %v649, -1e+09
      %v800 = vsel %vm768, %v603, -1e+09
      %v801 = vsel %vm769, %v652, -1e+09
      %v802 = vsel %vm770, %v605, -1e+09
      %v803 = vsel %vm771, %v654, -1e+09
      %v804 = vsel %vm772, %v608, -1e+09
      %v805 = vsel %vm773, %v657, -1e+09
      %v806 = vsel %vm774, %v610, -1e+09
      %v807 = vsel %vm775, %v659, -1e+09
      %v808 = vsel %vm776, %v613, -1e+09
      %v809 = vsel %vm777, %v662, -1e+09
      %v810 = vsel %vm778, %v615, -1e+09
      %v811 = vsel %vm779, %v664, -1e+09
      %v812 = vsel %vm780, %v618, -1e+09
      %v813 = vsel %vm781, %v667, -1e+09
      %v814 = vsel %vm782, %v620, -1e+09
      %v815 = vsel %vm783, %v669, -1e+09
      %v816 = vsel %vm784, %v623, -1e+09
      %v817 = vsel %vm785, %v672, -1e+09
      %v818 = vsel %vm786, %v625, -1e+09
      %v819 = vsel %vm787, %v674, -1e+09
      %v820 = vld [vmem:[#allocation2] sm:$0xff]
      %v821 = vld [vmem:[#allocation2 + $0x8] sm:$0xff]
      %v822 = vld [vmem:[#allocation2 + $0x10] sm:$0xff]
      %v823 = vld [vmem:[#allocation2 + $0x18] sm:$0xff]
      %v824 = vld [vmem:[#allocation2 + $0x20] sm:$0xff]
      %v825 = vld [vmem:[#allocation2 + $0x28] sm:$0xff]
      %v826 = vld [vmem:[#allocation2 + $0x30] sm:$0xff]
      %v827 = vld [vmem:[#allocation2 + $0x38] sm:$0xff]
      %v828 = vld [vmem:[#allocation2 + $0x40] sm:$0xff]
      %v829 = vld [vmem:[#allocation2 + $0x48] sm:$0xff]
      %v830 = vld [vmem:[#allocation2 + $0x50] sm:$0xff]
      %v831 = vld [vmem:[#allocation2 + $0x58] sm:$0xff]
      %v832 = vld [vmem:[#allocation2 + $0x60] sm:$0xff]
      %v833 = vld [vmem:[#allocation2 + $0x68] sm:$0xff]
      %v834 = vld [vmem:[#allocation2 + $0x70] sm:$0xff]
      %v835 = vld [vmem:[#allocation2 + $0x78] sm:$0xff]
      %v836 = vmax.f32 %v788, %v789
      %837 = vmax.xlane.f32.xlu0 %v836
      %v838 = vpop.xlane.xlu0 %837
      %v839 = vmax.f32 %v790, %v791
      %840 = vmax.xlane.f32.xlu0 %v839
      %v841 = vpop.xlane.xlu0 %840
      %v842 = vmax.f32 %v792, %v793
      %843 = vmax.xlane.f32.xlu0 %v842
      %v844 = vpop.xlane.xlu0 %843
      %v845 = vmax.f32 %v794, %v795
      %846 = vmax.xlane.f32.xlu0 %v845
      %v847 = vpop.xlane.xlu0 %846
      %v848 = vmax.f32 %v796, %v797
      %849 = vmax.xlane.f32.xlu0 %v848
      %v850 = vpop.xlane.xlu0 %849
      %v851 = vmax.f32 %v798, %v799
      %852 = vmax.xlane.f32.xlu0 %v851
      %v853 = vpop.xlane.xlu0 %852
      %v854 = vmax.f32 %v800, %v801
      %855 = vmax.xlane.f32.xlu0 %v854
      %v856 = vpop.xlane.xlu0 %855
      %v857 = vmax.f32 %v802, %v803
      %858 = vmax.xlane.f32.xlu0 %v857
      %v859 = vpop.xlane.xlu0 %858
      %v860 = vmax.f32 %v804, %v805
      %861 = vmax.xlane.f32.xlu0 %v860
      %v862 = vpop.xlane.xlu0 %861
      %v863 = vmax.f32 %v806, %v807
      %864 = vmax.xlane.f32.xlu0 %v863
      %v865 = vpop.xlane.xlu0 %864
      %v866 = vmax.f32 %v808, %v809
      %867 = vmax.xlane.f32.xlu0 %v866
      %v868 = vpop.xlane.xlu0 %867
      %v869 = vmax.f32 %v810, %v811
      %870 = vmax.xlane.f32.xlu0 %v869
      %v871 = vpop.xlane.xlu0 %870
      %v872 = vmax.f32 %v812, %v813
      %873 = vmax.xlane.f32.xlu0 %v872
      %v874 = vpop.xlane.xlu0 %873
      %v875 = vmax.f32 %v814, %v815
      %876 = vmax.xlane.f32.xlu0 %v875
      %v877 = vpop.xlane.xlu0 %876
      %v878 = vmax.f32 %v816, %v817
      %879 = vmax.xlane.f32.xlu0 %v878
      %v880 = vpop.xlane.xlu0 %879
      %v881 = vmax.f32 %v818, %v819
      %882 = vmax.xlane.f32.xlu0 %v881
      %v883 = vpop.xlane.xlu0 %882
      %v884 = vmax.f32 %v820, %v838
      %v885 = vmax.f32 %v821, %v841
      %v886 = vmax.f32 %v822, %v844
      %v887 = vmax.f32 %v823, %v847
      %v888 = vmax.f32 %v824, %v850
      %v889 = vmax.f32 %v825, %v853
      %v890 = vmax.f32 %v826, %v856
      %v891 = vmax.f32 %v827, %v859
      %v892 = vmax.f32 %v828, %v862
      %v893 = vmax.f32 %v829, %v865
      %v894 = vmax.f32 %v830, %v868
      %v895 = vmax.f32 %v831, %v871
      %v896 = vmax.f32 %v832, %v874
      %v897 = vmax.f32 %v833, %v877
      %v898 = vmax.f32 %v834, %v880
      %v899 = vmax.f32 %v835, %v883
      %v900 = vsub.f32 %v820, %v884
      %v901 = vsub.f32 %v821, %v885
      %v902 = vsub.f32 %v822, %v886
      %v903 = vsub.f32 %v823, %v887
      %v904 = vsub.f32 %v824, %v888
      %v905 = vsub.f32 %v825, %v889
      %v906 = vsub.f32 %v826, %v890
      %v907 = vsub.f32 %v827, %v891
      %v908 = vsub.f32 %v828, %v892
      %v909 = vsub.f32 %v829, %v893
      %v910 = vsub.f32 %v830, %v894
      %v911 = vsub.f32 %v831, %v895
      %v912 = vsub.f32 %v832, %v896
      %v913 = vsub.f32 %v833, %v897
      %v914 = vsub.f32 %v834, %v898
      %v915 = vsub.f32 %v835, %v899
      %v916 = vmul.f32 %v900, 1.442695
      %v917 = vpow.pop %v916
      %v918 = vmul.f32 %v901, 1.442695
      %v919 = vpow.pop %v918
      %v920 = vmul.f32 %v902, 1.442695
      %v921 = vpow.pop %v920
      %v922 = vmul.f32 %v903, 1.442695
      %v923 = vpow.pop %v922
      %v924 = vmul.f32 %v904, 1.442695
      %v925 = vpow.pop %v924
      %v926 = vmul.f32 %v905, 1.442695
      %v927 = vpow.pop %v926
      %v928 = vmul.f32 %v906, 1.442695
      %v929 = vpow.pop %v928
      %v930 = vmul.f32 %v907, 1.442695
      %v931 = vpow.pop %v930
      %v932 = vmul.f32 %v908, 1.442695
      %v933 = vpow.pop %v932
      %v934 = vmul.f32 %v909, 1.442695
      %v935 = vpow.pop %v934
      %v936 = vmul.f32 %v910, 1.442695
      %v937 = vpow.pop %v936
      %v938 = vmul.f32 %v911, 1.442695
      %v939 = vpow.pop %v938
      %v940 = vmul.f32 %v912, 1.442695
      %v941 = vpow.pop %v940
      %v942 = vmul.f32 %v913, 1.442695
      %v943 = vpow.pop %v942
      %v944 = vmul.f32 %v914, 1.442695
      %v945 = vpow.pop %v944
      %v946 = vmul.f32 %v915, 1.442695
      %v947 = vpow.pop %v946
      %v948 = vld [vmem:[#allocation3] sm:$0xff]
      %v949 = vld [vmem:[#allocation3 + $0x8] sm:$0xff]
      %v950 = vld [vmem:[#allocation3 + $0x10] sm:$0xff]
      %v951 = vld [vmem:[#allocation3 + $0x18] sm:$0xff]
      %v952 = vld [vmem:[#allocation3 + $0x20] sm:$0xff]
      %v953 = vld [vmem:[#allocation3 + $0x28] sm:$0xff]
      %v954 = vld [vmem:[#allocation3 + $0x30] sm:$0xff]
      %v955 = vld [vmem:[#allocation3 + $0x38] sm:$0xff]
      %v956 = vld [vmem:[#allocation3 + $0x40] sm:$0xff]
      %v957 = vld [vmem:[#allocation3 + $0x48] sm:$0xff]
      %v958 = vld [vmem:[#allocation3 + $0x50] sm:$0xff]
      %v959 = vld [vmem:[#allocation3 + $0x58] sm:$0xff]
      %v960 = vld [vmem:[#allocation3 + $0x60] sm:$0xff]
      %v961 = vld [vmem:[#allocation3 + $0x68] sm:$0xff]
      %v962 = vld [vmem:[#allocation3 + $0x70] sm:$0xff]
      %v963 = vld [vmem:[#allocation3 + $0x78] sm:$0xff]
      %v964 = vmul.f32 %v917, %v948
      %v965 = vmul.f32 %v919, %v949
      %v966 = vmul.f32 %v921, %v950
      %v967 = vmul.f32 %v923, %v951
      %v968 = vmul.f32 %v925, %v952
      %v969 = vmul.f32 %v927, %v953
      %v970 = vmul.f32 %v929, %v954
      %v971 = vmul.f32 %v931, %v955
      %v972 = vmul.f32 %v933, %v956
      %v973 = vmul.f32 %v935, %v957
      %v974 = vmul.f32 %v937, %v958
      %v975 = vmul.f32 %v939, %v959
      %v976 = vmul.f32 %v941, %v960
      %v977 = vmul.f32 %v943, %v961
      %v978 = vmul.f32 %v945, %v962
      %v979 = vmul.f32 %v947, %v963
      %981 = vset.pattern.permute.xlu0 0
      %982 = vperm.xlu0 %981, %v884
      %v983 = vpop.permute.xlu0 %982
      %986 = vset.pattern.permute.xlu0 0
      %987 = vperm.xlu0 %986, %v885
      %v988 = vpop.permute.xlu0 %987
      %991 = vset.pattern.permute.xlu0 0
      %992 = vperm.xlu0 %991, %v886
      %v993 = vpop.permute.xlu0 %992
      %996 = vset.pattern.permute.xlu0 0
      %997 = vperm.xlu0 %996, %v887
      %v998 = vpop.permute.xlu0 %997
      %1001 = vset.pattern.permute.xlu0 0
      %1002 = vperm.xlu0 %1001, %v888
      %v1003 = vpop.permute.xlu0 %1002
      %1006 = vset.pattern.permute.xlu0 0
      %1007 = vperm.xlu0 %1006, %v889
      %v1008 = vpop.permute.xlu0 %1007
      %1011 = vset.pattern.permute.xlu0 0
      %1012 = vperm.xlu0 %1011, %v890
      %v1013 = vpop.permute.xlu0 %1012
      %1016 = vset.pattern.permute.xlu0 0
      %1017 = vperm.xlu0 %1016, %v891
      %v1018 = vpop.permute.xlu0 %1017
      %1021 = vset.pattern.permute.xlu0 0
      %1022 = vperm.xlu0 %1021, %v892
      %v1023 = vpop.permute.xlu0 %1022
      %1026 = vset.pattern.permute.xlu0 0
      %1027 = vperm.xlu0 %1026, %v893
      %v1028 = vpop.permute.xlu0 %1027
      %1031 = vset.pattern.permute.xlu0 0
      %1032 = vperm.xlu0 %1031, %v894
      %v1033 = vpop.permute.xlu0 %1032
      %1036 = vset.pattern.permute.xlu0 0
      %1037 = vperm.xlu0 %1036, %v895
      %v1038 = vpop.permute.xlu0 %1037
      %1041 = vset.pattern.permute.xlu0 0
      %1042 = vperm.xlu0 %1041, %v896
      %v1043 = vpop.permute.xlu0 %1042
      %1046 = vset.pattern.permute.xlu0 0
      %1047 = vperm.xlu0 %1046, %v897
      %v1048 = vpop.permute.xlu0 %1047
      %1051 = vset.pattern.permute.xlu0 0
      %1052 = vperm.xlu0 %1051, %v898
      %v1053 = vpop.permute.xlu0 %1052
      %1056 = vset.pattern.permute.xlu0 0
      %1057 = vperm.xlu0 %1056, %v899
      %v1058 = vpop.permute.xlu0 %1057
      %v1060 = vsub.f32 %v788, %v983
      %v1061 = vsub.f32 %v789, %v983
      %v1062 = vsub.f32 %v790, %v988
      %v1063 = vsub.f32 %v791, %v988
      %v1064 = vsub.f32 %v792, %v993
      %v1065 = vsub.f32 %v793, %v993
      %v1066 = vsub.f32 %v794, %v998
      %v1067 = vsub.f32 %v795, %v998
      %v1068 = vsub.f32 %v796, %v1003
      %v1069 = vsub.f32 %v797, %v1003
      %v1070 = vsub.f32 %v798, %v1008
      %v1071 = vsub.f32 %v799, %v1008
      %v1072 = vsub.f32 %v800, %v1013
      %v1073 = vsub.f32 %v801, %v1013
      %v1074 = vsub.f32 %v802, %v1018
      %v1075 = vsub.f32 %v803, %v1018
      %v1076 = vsub.f32 %v804, %v1023
      %v1077 = vsub.f32 %v805, %v1023
      %v1078 = vsub.f32 %v806, %v1028
      %v1079 = vsub.f32 %v807, %v1028
      %v1080 = vsub.f32 %v808, %v1033
      %v1081 = vsub.f32 %v809, %v1033
      %v1082 = vsub.f32 %v810, %v1038
      %v1083 = vsub.f32 %v811, %v1038
      %v1084 = vsub.f32 %v812, %v1043
      %v1085 = vsub.f32 %v813, %v1043
      %v1086 = vsub.f32 %v814, %v1048
      %v1087 = vsub.f32 %v815, %v1048
      %v1088 = vsub.f32 %v816, %v1053
      %v1089 = vsub.f32 %v817, %v1053
      %v1090 = vsub.f32 %v818, %v1058
      %v1091 = vsub.f32 %v819, %v1058
      %v1092 = vmul.f32 %v1060, 1.442695
      %v1093 = vpow.pop %v1092
      %v1094 = vmul.f32 %v1061, 1.442695
      %v1095 = vpow.pop %v1094
      %v1096 = vmul.f32 %v1062, 1.442695
      %v1097 = vpow.pop %v1096
      %v1098 = vmul.f32 %v1063, 1.442695
      %v1099 = vpow.pop %v1098
      %v1100 = vmul.f32 %v1064, 1.442695
      %v1101 = vpow.pop %v1100
      %v1102 = vmul.f32 %v1065, 1.442695
      %v1103 = vpow.pop %v1102
      %v1104 = vmul.f32 %v1066, 1.442695
      %v1105 = vpow.pop %v1104
      %v1106 = vmul.f32 %v1067, 1.442695
      %v1107 = vpow.pop %v1106
      %v1108 = vmul.f32 %v1068, 1.442695
      %v1109 = vpow.pop %v1108
      %v1110 = vmul.f32 %v1069, 1.442695
      %v1111 = vpow.pop %v1110
      %v1112 = vmul.f32 %v1070, 1.442695
      %v1113 = vpow.pop %v1112
      %v1114 = vmul.f32 %v1071, 1.442695
      %v1115 = vpow.pop %v1114
      %v1116 = vmul.f32 %v1072, 1.442695
      %v1117 = vpow.pop %v1116
      %v1118 = vmul.f32 %v1073, 1.442695
      %v1119 = vpow.pop %v1118
      %v1120 = vmul.f32 %v1074, 1.442695
      %v1121 = vpow.pop %v1120
      %v1122 = vmul.f32 %v1075, 1.442695
      %v1123 = vpow.pop %v1122
      %v1124 = vmul.f32 %v1076, 1.442695
      %v1125 = vpow.pop %v1124
      %v1126 = vmul.f32 %v1077, 1.442695
      %v1127 = vpow.pop %v1126
      %v1128 = vmul.f32 %v1078, 1.442695
      %v1129 = vpow.pop %v1128
      %v1130 = vmul.f32 %v1079, 1.442695
      %v1131 = vpow.pop %v1130
      %v1132 = vmul.f32 %v1080, 1.442695
      %v1133 = vpow.pop %v1132
      %v1134 = vmul.f32 %v1081, 1.442695
      %v1135 = vpow.pop %v1134
      %v1136 = vmul.f32 %v1082, 1.442695
      %v1137 = vpow.pop %v1136
      %v1138 = vmul.f32 %v1083, 1.442695
      %v1139 = vpow.pop %v1138
      %v1140 = vmul.f32 %v1084, 1.442695
      %v1141 = vpow.pop %v1140
      %v1142 = vmul.f32 %v1085, 1.442695
      %v1143 = vpow.pop %v1142
      %v1144 = vmul.f32 %v1086, 1.442695
      %v1145 = vpow.pop %v1144
      %v1146 = vmul.f32 %v1087, 1.442695
      %v1147 = vpow.pop %v1146
      %v1148 = vmul.f32 %v1088, 1.442695
      %v1149 = vpow.pop %v1148
      %v1150 = vmul.f32 %v1089, 1.442695
      %v1151 = vpow.pop %v1150
      %v1152 = vmul.f32 %v1090, 1.442695
      %v1153 = vpow.pop %v1152
      %v1154 = vmul.f32 %v1091, 1.442695
      %v1155 = vpow.pop %v1154
      %v1156 = vadd.f32 %v1093, %v1095
      %1157 = vadd.xlane.f32.xlu0 %v1156
      %v1158 = vpop.xlane.xlu0 %1157
      %v1159 = vadd.f32 %v1097, %v1099
      %1160 = vadd.xlane.f32.xlu0 %v1159
      %v1161 = vpop.xlane.xlu0 %1160
      %v1162 = vadd.f32 %v1101, %v1103
      %1163 = vadd.xlane.f32.xlu0 %v1162
      %v1164 = vpop.xlane.xlu0 %1163
      %v1165 = vadd.f32 %v1105, %v1107
      %1166 = vadd.xlane.f32.xlu0 %v1165
      %v1167 = vpop.xlane.xlu0 %1166
      %v1168 = vadd.f32 %v1109, %v1111
      %1169 = vadd.xlane.f32.xlu0 %v1168
      %v1170 = vpop.xlane.xlu0 %1169
      %v1171 = vadd.f32 %v1113, %v1115
      %1172 = vadd.xlane.f32.xlu0 %v1171
      %v1173 = vpop.xlane.xlu0 %1172
      %v1174 = vadd.f32 %v1117, %v1119
      %1175 = vadd.xlane.f32.xlu0 %v1174
      %v1176 = vpop.xlane.xlu0 %1175
      %v1177 = vadd.f32 %v1121, %v1123
      %1178 = vadd.xlane.f32.xlu0 %v1177
      %v1179 = vpop.xlane.xlu0 %1178
      %v1180 = vadd.f32 %v1125, %v1127
      %1181 = vadd.xlane.f32.xlu0 %v1180
      %v1182 = vpop.xlane.xlu0 %1181
      %v1183 = vadd.f32 %v1129, %v1131
      %1184 = vadd.xlane.f32.xlu0 %v1183
      %v1185 = vpop.xlane.xlu0 %1184
      %v1186 = vadd.f32 %v1133, %v1135
      %1187 = vadd.xlane.f32.xlu0 %v1186
      %v1188 = vpop.xlane.xlu0 %1187
      %v1189 = vadd.f32 %v1137, %v1139
      %1190 = vadd.xlane.f32.xlu0 %v1189
      %v1191 = vpop.xlane.xlu0 %1190
      %v1192 = vadd.f32 %v1141, %v1143
      %1193 = vadd.xlane.f32.xlu0 %v1192
      %v1194 = vpop.xlane.xlu0 %1193
      %v1195 = vadd.f32 %v1145, %v1147
      %1196 = vadd.xlane.f32.xlu0 %v1195
      %v1197 = vpop.xlane.xlu0 %1196
      %v1198 = vadd.f32 %v1149, %v1151
      %1199 = vadd.xlane.f32.xlu0 %v1198
      %v1200 = vpop.xlane.xlu0 %1199
      %v1201 = vadd.f32 %v1153, %v1155
      %1202 = vadd.xlane.f32.xlu0 %v1201
      %v1203 = vpop.xlane.xlu0 %1202
      %v1204 = vadd.f32 %v964, %v1158
      %v1205 = vadd.f32 %v965, %v1161
      %v1206 = vadd.f32 %v966, %v1164
      %v1207 = vadd.f32 %v967, %v1167
      %v1208 = vadd.f32 %v968, %v1170
      %v1209 = vadd.f32 %v969, %v1173
      %v1210 = vadd.f32 %v970, %v1176
      %v1211 = vadd.f32 %v971, %v1179
      %v1212 = vadd.f32 %v972, %v1182
      %v1213 = vadd.f32 %v973, %v1185
      %v1214 = vadd.f32 %v974, %v1188
      %v1215 = vadd.f32 %v975, %v1191
      %v1216 = vadd.f32 %v976, %v1194
      %v1217 = vadd.f32 %v977, %v1197
      %v1218 = vadd.f32 %v978, %v1200
      %v1219 = vadd.f32 %v979, %v1203
      %vm1220 = vcmask 7168
      %1221 = vst.msk [vmem:[#allocation3] sm:$0xff] %vm1220, %v1204
      %1222 = vst.msk [vmem:[#allocation3 + $0x8] sm:$0xff] %vm1220, %v1205
      %1223 = vst.msk [vmem:[#allocation3 + $0x10] sm:$0xff] %vm1220, %v1206
      %1224 = vst.msk [vmem:[#allocation3 + $0x18] sm:$0xff] %vm1220, %v1207
      %1225 = vst.msk [vmem:[#allocation3 + $0x20] sm:$0xff] %vm1220, %v1208
      %1226 = vst.msk [vmem:[#allocation3 + $0x28] sm:$0xff] %vm1220, %v1209
      %1227 = vst.msk [vmem:[#allocation3 + $0x30] sm:$0xff] %vm1220, %v1210
      %1228 = vst.msk [vmem:[#allocation3 + $0x38] sm:$0xff] %vm1220, %v1211
      %1229 = vst.msk [vmem:[#allocation3 + $0x40] sm:$0xff] %vm1220, %v1212
      %1230 = vst.msk [vmem:[#allocation3 + $0x48] sm:$0xff] %vm1220, %v1213
      %1231 = vst.msk [vmem:[#allocation3 + $0x50] sm:$0xff] %vm1220, %v1214
      %1232 = vst.msk [vmem:[#allocation3 + $0x58] sm:$0xff] %vm1220, %v1215
      %1233 = vst.msk [vmem:[#allocation3 + $0x60] sm:$0xff] %vm1220, %v1216
      %1234 = vst.msk [vmem:[#allocation3 + $0x68] sm:$0xff] %vm1220, %v1217
      %1235 = vst.msk [vmem:[#allocation3 + $0x70] sm:$0xff] %vm1220, %v1218
      %1236 = vst.msk [vmem:[#allocation3 + $0x78] sm:$0xff] %vm1220, %v1219
      %1237 = vst.msk [vmem:[#allocation2] sm:$0xff] %vm1220, %v884
      %1238 = vst.msk [vmem:[#allocation2 + $0x8] sm:$0xff] %vm1220, %v885
      %1239 = vst.msk [vmem:[#allocation2 + $0x10] sm:$0xff] %vm1220, %v886
      %1240 = vst.msk [vmem:[#allocation2 + $0x18] sm:$0xff] %vm1220, %v887
      %1241 = vst.msk [vmem:[#allocation2 + $0x20] sm:$0xff] %vm1220, %v888
      %1242 = vst.msk [vmem:[#allocation2 + $0x28] sm:$0xff] %vm1220, %v889
      %1243 = vst.msk [vmem:[#allocation2 + $0x30] sm:$0xff] %vm1220, %v890
      %1244 = vst.msk [vmem:[#allocation2 + $0x38] sm:$0xff] %vm1220, %v891
      %1245 = vst.msk [vmem:[#allocation2 + $0x40] sm:$0xff] %vm1220, %v892
      %1246 = vst.msk [vmem:[#allocation2 + $0x48] sm:$0xff] %vm1220, %v893
      %1247 = vst.msk [vmem:[#allocation2 + $0x50] sm:$0xff] %vm1220, %v894
      %1248 = vst.msk [vmem:[#allocation2 + $0x58] sm:$0xff] %vm1220, %v895
      %1249 = vst.msk [vmem:[#allocation2 + $0x60] sm:$0xff] %vm1220, %v896
      %1250 = vst.msk [vmem:[#allocation2 + $0x68] sm:$0xff] %vm1220, %v897
      %1251 = vst.msk [vmem:[#allocation2 + $0x70] sm:$0xff] %vm1220, %v898
      %1252 = vst.msk [vmem:[#allocation2 + $0x78] sm:$0xff] %vm1220, %v899
      %v1253 = vld [vmem:[%s292] sm:$0xff]
      %v1254 = vld [vmem:[%s292 + $0x8] sm:$0xff]
      %v1255 = vld [vmem:[%s292 + $0x10] sm:$0xff]
      %v1256 = vld [vmem:[%s292 + $0x18] sm:$0xff]
      %v1257 = vld [vmem:[%s292 + $0x20] sm:$0xff]
      %v1258 = vld [vmem:[%s292 + $0x28] sm:$0xff]
      %v1259 = vld [vmem:[%s292 + $0x30] sm:$0xff]
      %v1260 = vld [vmem:[%s292 + $0x38] sm:$0xff]
      %v1261 = vld [vmem:[%s292 + $0x40] sm:$0xff]
      %v1262 = vld [vmem:[%s292 + $0x48] sm:$0xff]
      %v1263 = vld [vmem:[%s292 + $0x50] sm:$0xff]
      %v1264 = vld [vmem:[%s292 + $0x58] sm:$0xff]
      %v1265 = vld [vmem:[%s292 + $0x60] sm:$0xff]
      %v1266 = vld [vmem:[%s292 + $0x68] sm:$0xff]
      %v1267 = vld [vmem:[%s292 + $0x70] sm:$0xff]
      %v1268 = vld [vmem:[%s292 + $0x78] sm:$0xff]
      %v1269 = vld [vmem:[%s303] sm:$0x3]
      %1270 = vset.pattern.permute.xlu0 0
      %1271 = vperm.xlu0 %1270, %v1253
      %v1272 = vpop.permute.xlu0 %1271
      %1273 = vset.pattern.permute.xlu0 0
      %1274 = vperm.xlu0 %1273, %v1254
      %v1275 = vpop.permute.xlu0 %1274
      %1276 = vset.pattern.permute.xlu0 0
      %1277 = vperm.xlu0 %1276, %v1255
      %v1278 = vpop.permute.xlu0 %1277
      %1279 = vset.pattern.permute.xlu0 0
      %1280 = vperm.xlu0 %1279, %v1256
      %v1281 = vpop.permute.xlu0 %1280
      %1282 = vset.pattern.permute.xlu0 0
      %1283 = vperm.xlu0 %1282, %v1257
      %v1284 = vpop.permute.xlu0 %1283
      %1285 = vset.pattern.permute.xlu0 0
      %1286 = vperm.xlu0 %1285, %v1258
      %v1287 = vpop.permute.xlu0 %1286
      %1288 = vset.pattern.permute.xlu0 0
      %1289 = vperm.xlu0 %1288, %v1259
      %v1290 = vpop.permute.xlu0 %1289
      %1291 = vset.pattern.permute.xlu0 0
      %1292 = vperm.xlu0 %1291, %v1260
      %v1293 = vpop.permute.xlu0 %1292
      %1294 = vset.pattern.permute.xlu0 0
      %1295 = vperm.xlu0 %1294, %v1261
      %v1296 = vpop.permute.xlu0 %1295
      %1297 = vset.pattern.permute.xlu0 0
      %1298 = vperm.xlu0 %1297, %v1262
      %v1299 = vpop.permute.xlu0 %1298
      %1300 = vset.pattern.permute.xlu0 0
      %1301 = vperm.xlu0 %1300, %v1263
      %v1302 = vpop.permute.xlu0 %1301
      %1303 = vset.pattern.permute.xlu0 0
      %1304 = vperm.xlu0 %1303, %v1264
      %v1305 = vpop.permute.xlu0 %1304
      %1306 = vset.pattern.permute.xlu0 0
      %1307 = vperm.xlu0 %1306, %v1265
      %v1308 = vpop.permute.xlu0 %1307
      %1309 = vset.pattern.permute.xlu0 0
      %1310 = vperm.xlu0 %1309, %v1266
      %v1311 = vpop.permute.xlu0 %1310
      %1312 = vset.pattern.permute.xlu0 0
      %1313 = vperm.xlu0 %1312, %v1267
      %v1314 = vpop.permute.xlu0 %1313
      %1315 = vset.pattern.permute.xlu0 0
      %1316 = vperm.xlu0 %1315, %v1268
      %v1317 = vpop.permute.xlu0 %1316
      %v1318 = vperm.slane %v1269, 0
      %v1319 = vperm.slane %v1269, 1
      %vm1320 = vcmp.eq.s32.totalorder %v1272, %v1318
      %vm1321 = vcmp.eq.s32.totalorder %v1272, %v1319
      %vm1322 = vcmp.eq.s32.totalorder %v1275, %v1318
      %vm1323 = vcmp.eq.s32.totalorder %v1275, %v1319
      %vm1324 = vcmp.eq.s32.totalorder %v1278, %v1318
      %vm1325 = vcmp.eq.s32.totalorder %v1278, %v1319
      %vm1326 = vcmp.eq.s32.totalorder %v1281, %v1318
      %vm1327 = vcmp.eq.s32.totalorder %v1281, %v1319
      %vm1328 = vcmp.eq.s32.totalorder %v1284, %v1318
      %vm1329 = vcmp.eq.s32.totalorder %v1284, %v1319
      %vm1330 = vcmp.eq.s32.totalorder %v1287, %v1318
      %vm1331 = vcmp.eq.s32.totalorder %v1287, %v1319
      %vm1332 = vcmp.eq.s32.totalorder %v1290, %v1318
      %vm1333 = vcmp.eq.s32.totalorder %v1290, %v1319
      %vm1334 = vcmp.eq.s32.totalorder %v1293, %v1318
      %vm1335 = vcmp.eq.s32.totalorder %v1293, %v1319
      %vm1336 = vcmp.eq.s32.totalorder %v1296, %v1318
      %vm1337 = vcmp.eq.s32.totalorder %v1296, %v1319
      %vm1338 = vcmp.eq.s32.totalorder %v1299, %v1318
      %vm1339 = vcmp.eq.s32.totalorder %v1299, %v1319
      %vm1340 = vcmp.eq.s32.totalorder %v1302, %v1318
      %vm1341 = vcmp.eq.s32.totalorder %v1302, %v1319
      %vm1342 = vcmp.eq.s32.totalorder %v1305, %v1318
      %vm1343 = vcmp.eq.s32.totalorder %v1305, %v1319
      %vm1344 = vcmp.eq.s32.totalorder %v1308, %v1318
      %vm1345 = vcmp.eq.s32.totalorder %v1308, %v1319
      %vm1346 = vcmp.eq.s32.totalorder %v1311, %v1318
      %vm1347 = vcmp.eq.s32.totalorder %v1311, %v1319
      %vm1348 = vcmp.eq.s32.totalorder %v1314, %v1318
      %vm1349 = vcmp.eq.s32.totalorder %v1314, %v1319
      %vm1350 = vcmp.eq.s32.totalorder %v1317, %v1318
      %vm1351 = vcmp.eq.s32.totalorder %v1317, %v1319
      %vm1352 = vmand %vm1320, %vm756
      %vm1353 = vmand %vm1321, %vm757
      %vm1354 = vmand %vm1322, %vm758
      %vm1355 = vmand %vm1323, %vm759
      %vm1356 = vmand %vm1324, %vm760
      %vm1357 = vmand %vm1325, %vm761
      %vm1358 = vmand %vm1326, %vm762
      %vm1359 = vmand %vm1327, %vm763
      %vm1360 = vmand %vm1328, %vm764
      %vm1361 = vmand %vm1329, %vm765
      %vm1362 = vmand %vm1330, %vm766
      %vm1363 = vmand %vm1331, %vm767
      %vm1364 = vmand %vm1332, %vm768
      %vm1365 = vmand %vm1333, %vm769
      %vm1366 = vmand %vm1334, %vm770
      %vm1367 = vmand %vm1335, %vm771
      %vm1368 = vmand %vm1336, %vm772
      %vm1369 = vmand %vm1337, %vm773
      %vm1370 = vmand %vm1338, %vm774
      %vm1371 = vmand %vm1339, %vm775
      %vm1372 = vmand %vm1340, %vm776
      %vm1373 = vmand %vm1341, %vm777
      %vm1374 = vmand %vm1342, %vm778
      %vm1375 = vmand %vm1343, %vm779
      %vm1376 = vmand %vm1344, %vm780
      %vm1377 = vmand %vm1345, %vm781
      %vm1378 = vmand %vm1346, %vm782
      %vm1379 = vmand %vm1347, %vm783
      %vm1380 = vmand %vm1348, %vm784
      %vm1381 = vmand %vm1349, %vm785
      %vm1382 = vmand %vm1350, %vm786
      %vm1383 = vmand %vm1351, %vm787
      %v1384 = vsel %vm1352, 1, 0
      %v1385 = vsel %vm1353, 1, 0
      %v1386 = vsel %vm1354, 1, 0
      %v1387 = vsel %vm1355, 1, 0
      %v1388 = vsel %vm1356, 1, 0
      %v1389 = vsel %vm1357, 1, 0
      %v1390 = vsel %vm1358, 1, 0
      %v1391 = vsel %vm1359, 1, 0
      %v1392 = vsel %vm1360, 1, 0
      %v1393 = vsel %vm1361, 1, 0
      %v1394 = vsel %vm1362, 1, 0
      %v1395 = vsel %vm1363, 1, 0
      %v1396 = vsel %vm1364, 1, 0
      %v1397 = vsel %vm1365, 1, 0
      %v1398 = vsel %vm1366, 1, 0
      %v1399 = vsel %vm1367, 1, 0
      %v1400 = vsel %vm1368, 1, 0
      %v1401 = vsel %vm1369, 1, 0
      %v1402 = vsel %vm1370, 1, 0
      %v1403 = vsel %vm1371, 1, 0
      %v1404 = vsel %vm1372, 1, 0
      %v1405 = vsel %vm1373, 1, 0
      %v1406 = vsel %vm1374, 1, 0
      %v1407 = vsel %vm1375, 1, 0
      %v1408 = vsel %vm1376, 1, 0
      %v1409 = vsel %vm1377, 1, 0
      %v1410 = vsel %vm1378, 1, 0
      %v1411 = vsel %vm1379, 1, 0
      %v1412 = vsel %vm1380, 1, 0
      %v1413 = vsel %vm1381, 1, 0
      %v1414 = vsel %vm1382, 1, 0
      %v1415 = vsel %vm1383, 1, 0
      %v1416 = vcvt.s32.f32 %v1384
      %v1417 = vcvt.s32.f32 %v1385
      %v1418 = vcvt.s32.f32 %v1386
      %v1419 = vcvt.s32.f32 %v1387
      %v1420 = vcvt.s32.f32 %v1388
      %v1421 = vcvt.s32.f32 %v1389
      %v1422 = vcvt.s32.f32 %v1390
      %v1423 = vcvt.s32.f32 %v1391
      %v1424 = vcvt.s32.f32 %v1392
      %v1425 = vcvt.s32.f32 %v1393
      %v1426 = vcvt.s32.f32 %v1394
      %v1427 = vcvt.s32.f32 %v1395
      %v1428 = vcvt.s32.f32 %v1396
      %v1429 = vcvt.s32.f32 %v1397
      %v1430 = vcvt.s32.f32 %v1398
      %v1431 = vcvt.s32.f32 %v1399
      %v1432 = vcvt.s32.f32 %v1400
      %v1433 = vcvt.s32.f32 %v1401
      %v1434 = vcvt.s32.f32 %v1402
      %v1435 = vcvt.s32.f32 %v1403
      %v1436 = vcvt.s32.f32 %v1404
      %v1437 = vcvt.s32.f32 %v1405
      %v1438 = vcvt.s32.f32 %v1406
      %v1439 = vcvt.s32.f32 %v1407
      %v1440 = vcvt.s32.f32 %v1408
      %v1441 = vcvt.s32.f32 %v1409
      %v1442 = vcvt.s32.f32 %v1410
      %v1443 = vcvt.s32.f32 %v1411
      %v1444 = vcvt.s32.f32 %v1412
      %v1445 = vcvt.s32.f32 %v1413
      %v1446 = vcvt.s32.f32 %v1414
      %v1447 = vcvt.s32.f32 %v1415
      %v1448 = vld [vmem:[#allocation4] sm:$0xff]
      %v1449 = vld [vmem:[#allocation4 + $0x8] sm:$0xff]
      %v1450 = vld [vmem:[#allocation4 + $0x10] sm:$0xff]
      %v1451 = vld [vmem:[#allocation4 + $0x18] sm:$0xff]
      %v1452 = vld [vmem:[#allocation4 + $0x20] sm:$0xff]
      %v1453 = vld [vmem:[#allocation4 + $0x28] sm:$0xff]
      %v1454 = vld [vmem:[#allocation4 + $0x30] sm:$0xff]
      %v1455 = vld [vmem:[#allocation4 + $0x38] sm:$0xff]
      %v1456 = vld [vmem:[#allocation4 + $0x40] sm:$0xff]
      %v1457 = vld [vmem:[#allocation4 + $0x48] sm:$0xff]
      %v1458 = vld [vmem:[#allocation4 + $0x50] sm:$0xff]
      %v1459 = vld [vmem:[#allocation4 + $0x58] sm:$0xff]
      %v1460 = vld [vmem:[#allocation4 + $0x60] sm:$0xff]
      %v1461 = vld [vmem:[#allocation4 + $0x68] sm:$0xff]
      %v1462 = vld [vmem:[#allocation4 + $0x70] sm:$0xff]
      %v1463 = vld [vmem:[#allocation4 + $0x78] sm:$0xff]
      %v1464 = vmul.f32 %v1416, %v788
      %v1465 = vmul.f32 %v1417, %v789
      %v1466 = vmul.f32 %v1418, %v790
      %v1467 = vmul.f32 %v1419, %v791
      %v1468 = vmul.f32 %v1420, %v792
      %v1469 = vmul.f32 %v1421, %v793
      %v1470 = vmul.f32 %v1422, %v794
      %v1471 = vmul.f32 %v1423, %v795
      %v1472 = vmul.f32 %v1424, %v796
      %v1473 = vmul.f32 %v1425, %v797
      %v1474 = vmul.f32 %v1426, %v798
      %v1475 = vmul.f32 %v1427, %v799
      %v1476 = vmul.f32 %v1428, %v800
      %v1477 = vmul.f32 %v1429, %v801
      %v1478 = vmul.f32 %v1430, %v802
      %v1479 = vmul.f32 %v1431, %v803
      %v1480 = vmul.f32 %v1432, %v804
      %v1481 = vmul.f32 %v1433, %v805
      %v1482 = vmul.f32 %v1434, %v806
      %v1483 = vmul.f32 %v1435, %v807
      %v1484 = vmul.f32 %v1436, %v808
      %v1485 = vmul.f32 %v1437, %v809
      %v1486 = vmul.f32 %v1438, %v810
      %v1487 = vmul.f32 %v1439, %v811
      %v1488 = vmul.f32 %v1440, %v812
      %v1489 = vmul.f32 %v1441, %v813
      %v1490 = vmul.f32 %v1442, %v814
      %v1491 = vmul.f32 %v1443, %v815
      %v1492 = vmul.f32 %v1444, %v816
      %v1493 = vmul.f32 %v1445, %v817
      %v1494 = vmul.f32 %v1446, %v818
      %v1495 = vmul.f32 %v1447, %v819
      %v1496 = vadd.f32 %v1464, %v1465
      %1497 = vadd.xlane.f32.xlu0 %v1496
      %v1498 = vpop.xlane.xlu0 %1497
      %v1499 = vadd.f32 %v1466, %v1467
      %1500 = vadd.xlane.f32.xlu0 %v1499
      %v1501 = vpop.xlane.xlu0 %1500
      %v1502 = vadd.f32 %v1468, %v1469
      %1503 = vadd.xlane.f32.xlu0 %v1502
      %v1504 = vpop.xlane.xlu0 %1503
      %v1505 = vadd.f32 %v1470, %v1471
      %1506 = vadd.xlane.f32.xlu0 %v1505
      %v1507 = vpop.xlane.xlu0 %1506
      %v1508 = vadd.f32 %v1472, %v1473
      %1509 = vadd.xlane.f32.xlu0 %v1508
      %v1510 = vpop.xlane.xlu0 %1509
      %v1511 = vadd.f32 %v1474, %v1475
      %1512 = vadd.xlane.f32.xlu0 %v1511
      %v1513 = vpop.xlane.xlu0 %1512
      %v1514 = vadd.f32 %v1476, %v1477
      %1515 = vadd.xlane.f32.xlu0 %v1514
      %v1516 = vpop.xlane.xlu0 %1515
      %v1517 = vadd.f32 %v1478, %v1479
      %1518 = vadd.xlane.f32.xlu0 %v1517
      %v1519 = vpop.xlane.xlu0 %1518
      %v1520 = vadd.f32 %v1480, %v1481
      %1521 = vadd.xlane.f32.xlu0 %v1520
      %v1522 = vpop.xlane.xlu0 %1521
      %v1523 = vadd.f32 %v1482, %v1483
      %1524 = vadd.xlane.f32.xlu0 %v1523
      %v1525 = vpop.xlane.xlu0 %1524
      %v1526 = vadd.f32 %v1484, %v1485
      %1527 = vadd.xlane.f32.xlu0 %v1526
      %v1528 = vpop.xlane.xlu0 %1527
      %v1529 = vadd.f32 %v1486, %v1487
      %1530 = vadd.xlane.f32.xlu0 %v1529
      %v1531 = vpop.xlane.xlu0 %1530
      %v1532 = vadd.f32 %v1488, %v1489
      %1533 = vadd.xlane.f32.xlu0 %v1532
      %v1534 = vpop.xlane.xlu0 %1533
      %v1535 = vadd.f32 %v1490, %v1491
      %1536 = vadd.xlane.f32.xlu0 %v1535
      %v1537 = vpop.xlane.xlu0 %1536
      %v1538 = vadd.f32 %v1492, %v1493
      %1539 = vadd.xlane.f32.xlu0 %v1538
      %v1540 = vpop.xlane.xlu0 %1539
      %v1541 = vadd.f32 %v1494, %v1495
      %1542 = vadd.xlane.f32.xlu0 %v1541
      %v1543 = vpop.xlane.xlu0 %1542
      %v1544 = vadd.f32 %v1448, %v1498
      %v1545 = vadd.f32 %v1449, %v1501
      %v1546 = vadd.f32 %v1450, %v1504
      %v1547 = vadd.f32 %v1451, %v1507
      %v1548 = vadd.f32 %v1452, %v1510
      %v1549 = vadd.f32 %v1453, %v1513
      %v1550 = vadd.f32 %v1454, %v1516
      %v1551 = vadd.f32 %v1455, %v1519
      %v1552 = vadd.f32 %v1456, %v1522
      %v1553 = vadd.f32 %v1457, %v1525
      %v1554 = vadd.f32 %v1458, %v1528
      %v1555 = vadd.f32 %v1459, %v1531
      %v1556 = vadd.f32 %v1460, %v1534
      %v1557 = vadd.f32 %v1461, %v1537
      %v1558 = vadd.f32 %v1462, %v1540
      %v1559 = vadd.f32 %v1463, %v1543
      %1560 = vst.msk [vmem:[#allocation4] sm:$0xff] %vm1220, %v1544
      %1561 = vst.msk [vmem:[#allocation4 + $0x8] sm:$0xff] %vm1220, %v1545
      %1562 = vst.msk [vmem:[#allocation4 + $0x10] sm:$0xff] %vm1220, %v1546
      %1563 = vst.msk [vmem:[#allocation4 + $0x18] sm:$0xff] %vm1220, %v1547
      %1564 = vst.msk [vmem:[#allocation4 + $0x20] sm:$0xff] %vm1220, %v1548
      %1565 = vst.msk [vmem:[#allocation4 + $0x28] sm:$0xff] %vm1220, %v1549
      %1566 = vst.msk [vmem:[#allocation4 + $0x30] sm:$0xff] %vm1220, %v1550
      %1567 = vst.msk [vmem:[#allocation4 + $0x38] sm:$0xff] %vm1220, %v1551
      %1568 = vst.msk [vmem:[#allocation4 + $0x40] sm:$0xff] %vm1220, %v1552
      %1569 = vst.msk [vmem:[#allocation4 + $0x48] sm:$0xff] %vm1220, %v1553
      %1570 = vst.msk [vmem:[#allocation4 + $0x50] sm:$0xff] %vm1220, %v1554
      %1571 = vst.msk [vmem:[#allocation4 + $0x58] sm:$0xff] %vm1220, %v1555
      %1572 = vst.msk [vmem:[#allocation4 + $0x60] sm:$0xff] %vm1220, %v1556
      %1573 = vst.msk [vmem:[#allocation4 + $0x68] sm:$0xff] %vm1220, %v1557
      %1574 = vst.msk [vmem:[#allocation4 + $0x70] sm:$0xff] %vm1220, %v1558
      %1575 = vst.msk [vmem:[#allocation4 + $0x78] sm:$0xff] %vm1220, %v1559
      %v1576 = vld [vmem:[#allocation5] sm:$0xff]
      %v1577 = vld [vmem:[#allocation5 + $0x8] sm:$0xff]
      %v1578 = vld [vmem:[#allocation5 + $0x10] sm:$0xff]
      %v1579 = vld [vmem:[#allocation5 + $0x18] sm:$0xff]
      %v1580 = vld [vmem:[#allocation5 + $0x20] sm:$0xff]
      %v1581 = vld [vmem:[#allocation5 + $0x28] sm:$0xff]
      %v1582 = vld [vmem:[#allocation5 + $0x30] sm:$0xff]
      %v1583 = vld [vmem:[#allocation5 + $0x38] sm:$0xff]
      %v1584 = vld [vmem:[#allocation5 + $0x40] sm:$0xff]
      %v1585 = vld [vmem:[#allocation5 + $0x48] sm:$0xff]
      %v1586 = vld [vmem:[#allocation5 + $0x50] sm:$0xff]
      %v1587 = vld [vmem:[#allocation5 + $0x58] sm:$0xff]
      %v1588 = vld [vmem:[#allocation5 + $0x60] sm:$0xff]
      %v1589 = vld [vmem:[#allocation5 + $0x68] sm:$0xff]
      %v1590 = vld [vmem:[#allocation5 + $0x70] sm:$0xff]
      %v1591 = vld [vmem:[#allocation5 + $0x78] sm:$0xff]
      %v1592 = vadd.f32 %v1416, %v1417
      %1593 = vadd.xlane.f32.xlu0 %v1592
      %v1594 = vpop.xlane.xlu0 %1593
      %v1595 = vadd.f32 %v1418, %v1419
      %1596 = vadd.xlane.f32.xlu0 %v1595
      %v1597 = vpop.xlane.xlu0 %1596
      %v1598 = vadd.f32 %v1420, %v1421
      %1599 = vadd.xlane.f32.xlu0 %v1598
      %v1600 = vpop.xlane.xlu0 %1599
      %v1601 = vadd.f32 %v1422, %v1423
      %1602 = vadd.xlane.f32.xlu0 %v1601
      %v1603 = vpop.xlane.xlu0 %1602
      %v1604 = vadd.f32 %v1424, %v1425
      %1605 = vadd.xlane.f32.xlu0 %v1604
      %v1606 = vpop.xlane.xlu0 %1605
      %v1607 = vadd.f32 %v1426, %v1427
      %1608 = vadd.xlane.f32.xlu0 %v1607
      %v1609 = vpop.xlane.xlu0 %1608
      %v1610 = vadd.f32 %v1428, %v1429
      %1611 = vadd.xlane.f32.xlu0 %v1610
      %v1612 = vpop.xlane.xlu0 %1611
      %v1613 = vadd.f32 %v1430, %v1431
      %1614 = vadd.xlane.f32.xlu0 %v1613
      %v1615 = vpop.xlane.xlu0 %1614
      %v1616 = vadd.f32 %v1432, %v1433
      %1617 = vadd.xlane.f32.xlu0 %v1616
      %v1618 = vpop.xlane.xlu0 %1617
      %v1619 = vadd.f32 %v1434, %v1435
      %1620 = vadd.xlane.f32.xlu0 %v1619
      %v1621 = vpop.xlane.xlu0 %1620
      %v1622 = vadd.f32 %v1436, %v1437
      %1623 = vadd.xlane.f32.xlu0 %v1622
      %v1624 = vpop.xlane.xlu0 %1623
      %v1625 = vadd.f32 %v1438, %v1439
      %1626 = vadd.xlane.f32.xlu0 %v1625
      %v1627 = vpop.xlane.xlu0 %1626
      %v1628 = vadd.f32 %v1440, %v1441
      %1629 = vadd.xlane.f32.xlu0 %v1628
      %v1630 = vpop.xlane.xlu0 %1629
      %v1631 = vadd.f32 %v1442, %v1443
      %1632 = vadd.xlane.f32.xlu0 %v1631
      %v1633 = vpop.xlane.xlu0 %1632
      %v1634 = vadd.f32 %v1444, %v1445
      %1635 = vadd.xlane.f32.xlu0 %v1634
      %v1636 = vpop.xlane.xlu0 %1635
      %v1637 = vadd.f32 %v1446, %v1447
      %1638 = vadd.xlane.f32.xlu0 %v1637
      %v1639 = vpop.xlane.xlu0 %1638
      %v1640 = vadd.f32 %v1576, %v1594
      %v1641 = vadd.f32 %v1577, %v1597
      %v1642 = vadd.f32 %v1578, %v1600
      %v1643 = vadd.f32 %v1579, %v1603
      %v1644 = vadd.f32 %v1580, %v1606
      %v1645 = vadd.f32 %v1581, %v1609
      %v1646 = vadd.f32 %v1582, %v1612
      %v1647 = vadd.f32 %v1583, %v1615
      %v1648 = vadd.f32 %v1584, %v1618
      %v1649 = vadd.f32 %v1585, %v1621
      %v1650 = vadd.f32 %v1586, %v1624
      %v1651 = vadd.f32 %v1587, %v1627
      %v1652 = vadd.f32 %v1588, %v1630
      %v1653 = vadd.f32 %v1589, %v1633
      %v1654 = vadd.f32 %v1590, %v1636
      %v1655 = vadd.f32 %v1591, %v1639
      %1656 = vst.msk [vmem:[#allocation5] sm:$0xff] %vm1220, %v1640
      %1657 = vst.msk [vmem:[#allocation5 + $0x8] sm:$0xff] %vm1220, %v1641
      %1658 = vst.msk [vmem:[#allocation5 + $0x10] sm:$0xff] %vm1220, %v1642
      %1659 = vst.msk [vmem:[#allocation5 + $0x18] sm:$0xff] %vm1220, %v1643
      %1660 = vst.msk [vmem:[#allocation5 + $0x20] sm:$0xff] %vm1220, %v1644
      %1661 = vst.msk [vmem:[#allocation5 + $0x28] sm:$0xff] %vm1220, %v1645
      %1662 = vst.msk [vmem:[#allocation5 + $0x30] sm:$0xff] %vm1220, %v1646
      %1663 = vst.msk [vmem:[#allocation5 + $0x38] sm:$0xff] %vm1220, %v1647
      %1664 = vst.msk [vmem:[#allocation5 + $0x40] sm:$0xff] %vm1220, %v1648
      %1665 = vst.msk [vmem:[#allocation5 + $0x48] sm:$0xff] %vm1220, %v1649
      %1666 = vst.msk [vmem:[#allocation5 + $0x50] sm:$0xff] %vm1220, %v1650
      %1667 = vst.msk [vmem:[#allocation5 + $0x58] sm:$0xff] %vm1220, %v1651
      %1668 = vst.msk [vmem:[#allocation5 + $0x60] sm:$0xff] %vm1220, %v1652
      %1669 = vst.msk [vmem:[#allocation5 + $0x68] sm:$0xff] %vm1220, %v1653
      %1670 = vst.msk [vmem:[#allocation5 + $0x70] sm:$0xff] %vm1220, %v1654
      %1671 = vst.msk [vmem:[#allocation5 + $0x78] sm:$0xff] %vm1220, %v1655
      // Predicated region
      $region41: #{tpu_custom_call.1} parent=35 // pred_check
        %p1672 = pneg %p317
      $region42: #{tpu_custom_call.1} parent=35 // pred_check_branch
        %1674 = sbr.rel (%p1672) target = $region44
      $region43: #{tpu_custom_call.1} parent=35 // pred_region
        %v1675 = vld [vmem:[#allocation5] sm:$0xff]
        %v1676 = vld [vmem:[#allocation5 + $0x8] sm:$0xff]
        %v1677 = vld [vmem:[#allocation5 + $0x10] sm:$0xff]
        %v1678 = vld [vmem:[#allocation5 + $0x18] sm:$0xff]
        %v1679 = vld [vmem:[#allocation5 + $0x20] sm:$0xff]
        %v1680 = vld [vmem:[#allocation5 + $0x28] sm:$0xff]
        %v1681 = vld [vmem:[#allocation5 + $0x30] sm:$0xff]
        %v1682 = vld [vmem:[#allocation5 + $0x38] sm:$0xff]
        %v1683 = vld [vmem:[#allocation5 + $0x40] sm:$0xff]
        %v1684 = vld [vmem:[#allocation5 + $0x48] sm:$0xff]
        %v1685 = vld [vmem:[#allocation5 + $0x50] sm:$0xff]
        %v1686 = vld [vmem:[#allocation5 + $0x58] sm:$0xff]
        %v1687 = vld [vmem:[#allocation5 + $0x60] sm:$0xff]
        %v1688 = vld [vmem:[#allocation5 + $0x68] sm:$0xff]
        %v1689 = vld [vmem:[#allocation5 + $0x70] sm:$0xff]
        %v1690 = vld [vmem:[#allocation5 + $0x78] sm:$0xff]
        %v1691 = vld [vmem:[#allocation2] sm:$0xff]
        %v1692 = vld [vmem:[#allocation2 + $0x8] sm:$0xff]
        %v1693 = vld [vmem:[#allocation2 + $0x10] sm:$0xff]
        %v1694 = vld [vmem:[#allocation2 + $0x18] sm:$0xff]
        %v1695 = vld [vmem:[#allocation2 + $0x20] sm:$0xff]
        %v1696 = vld [vmem:[#allocation2 + $0x28] sm:$0xff]
        %v1697 = vld [vmem:[#allocation2 + $0x30] sm:$0xff]
        %v1698 = vld [vmem:[#allocation2 + $0x38] sm:$0xff]
        %v1699 = vld [vmem:[#allocation2 + $0x40] sm:$0xff]
        %v1700 = vld [vmem:[#allocation2 + $0x48] sm:$0xff]
        %v1701 = vld [vmem:[#allocation2 + $0x50] sm:$0xff]
        %v1702 = vld [vmem:[#allocation2 + $0x58] sm:$0xff]
        %v1703 = vld [vmem:[#allocation2 + $0x60] sm:$0xff]
        %v1704 = vld [vmem:[#allocation2 + $0x68] sm:$0xff]
        %v1705 = vld [vmem:[#allocation2 + $0x70] sm:$0xff]
        %v1706 = vld [vmem:[#allocation2 + $0x78] sm:$0xff]
        %v1707 = vld [vmem:[#allocation3] sm:$0xff]
        %v1708 = vld [vmem:[#allocation3 + $0x8] sm:$0xff]
        %v1709 = vld [vmem:[#allocation3 + $0x10] sm:$0xff]
        %v1710 = vld [vmem:[#allocation3 + $0x18] sm:$0xff]
        %v1711 = vld [vmem:[#allocation3 + $0x20] sm:$0xff]
        %v1712 = vld [vmem:[#allocation3 + $0x28] sm:$0xff]
        %v1713 = vld [vmem:[#allocation3 + $0x30] sm:$0xff]
        %v1714 = vld [vmem:[#allocation3 + $0x38] sm:$0xff]
        %v1715 = vld [vmem:[#allocation3 + $0x40] sm:$0xff]
        %v1716 = vld [vmem:[#allocation3 + $0x48] sm:$0xff]
        %v1717 = vld [vmem:[#allocation3 + $0x50] sm:$0xff]
        %v1718 = vld [vmem:[#allocation3 + $0x58] sm:$0xff]
        %v1719 = vld [vmem:[#allocation3 + $0x60] sm:$0xff]
        %v1720 = vld [vmem:[#allocation3 + $0x68] sm:$0xff]
        %v1721 = vld [vmem:[#allocation3 + $0x70] sm:$0xff]
        %v1722 = vld [vmem:[#allocation3 + $0x78] sm:$0xff]
        %v1723 = vadd.f32 %v1707, 1e-12
        %v1724 = vadd.f32 %v1708, 1e-12
        %v1725 = vadd.f32 %v1709, 1e-12
        %v1726 = vadd.f32 %v1710, 1e-12
        %v1727 = vadd.f32 %v1711, 1e-12
        %v1728 = vadd.f32 %v1712, 1e-12
        %v1729 = vadd.f32 %v1713, 1e-12
        %v1730 = vadd.f32 %v1714, 1e-12
        %v1731 = vadd.f32 %v1715, 1e-12
        %v1732 = vadd.f32 %v1716, 1e-12
        %v1733 = vadd.f32 %v1717, 1e-12
        %v1734 = vadd.f32 %v1718, 1e-12
        %v1735 = vadd.f32 %v1719, 1e-12
        %v1736 = vadd.f32 %v1720, 1e-12
        %v1737 = vadd.f32 %v1721, 1e-12
        %v1738 = vadd.f32 %v1722, 1e-12
        %v1739 = vlog2.pop %v1723
        %v1740 = vmul.f32 %v1739, 0.6931472
        %v1741 = vlog2.pop %v1724
        %v1742 = vmul.f32 %v1741, 0.6931472
        %v1743 = vlog2.pop %v1725
        %v1744 = vmul.f32 %v1743, 0.6931472
        %v1745 = vlog2.pop %v1726
        %v1746 = vmul.f32 %v1745, 0.6931472
        %v1747 = vlog2.pop %v1727
        %v1748 = vmul.f32 %v1747, 0.6931472
        %v1749 = vlog2.pop %v1728
        %v1750 = vmul.f32 %v1749, 0.6931472
        %v1751 = vlog2.pop %v1729
        %v1752 = vmul.f32 %v1751, 0.6931472
        %v1753 = vlog2.pop %v1730
        %v1754 = vmul.f32 %v1753, 0.6931472
        %v1755 = vlog2.pop %v1731
        %v1756 = vmul.f32 %v1755, 0.6931472
        %v1757 = vlog2.pop %v1732
        %v1758 = vmul.f32 %v1757, 0.6931472
        %v1759 = vlog2.pop %v1733
        %v1760 = vmul.f32 %v1759, 0.6931472
        %v1761 = vlog2.pop %v1734
        %v1762 = vmul.f32 %v1761, 0.6931472
        %v1763 = vlog2.pop %v1735
        %v1764 = vmul.f32 %v1763, 0.6931472
        %v1765 = vlog2.pop %v1736
        %v1766 = vmul.f32 %v1765, 0.6931472
        %v1767 = vlog2.pop %v1737
        %v1768 = vmul.f32 %v1767, 0.6931472
        %v1769 = vlog2.pop %v1738
        %v1770 = vmul.f32 %v1769, 0.6931472
        %v1771 = vadd.f32 %v1691, %v1740
        %v1772 = vadd.f32 %v1692, %v1742
        %v1773 = vadd.f32 %v1693, %v1744
        %v1774 = vadd.f32 %v1694, %v1746
        %v1775 = vadd.f32 %v1695, %v1748
        %v1776 = vadd.f32 %v1696, %v1750
        %v1777 = vadd.f32 %v1697, %v1752
        %v1778 = vadd.f32 %v1698, %v1754
        %v1779 = vadd.f32 %v1699, %v1756
        %v1780 = vadd.f32 %v1700, %v1758
        %v1781 = vadd.f32 %v1701, %v1760
        %v1782 = vadd.f32 %v1702, %v1762
        %v1783 = vadd.f32 %v1703, %v1764
        %v1784 = vadd.f32 %v1704, %v1766
        %v1785 = vadd.f32 %v1705, %v1768
        %v1786 = vadd.f32 %v1706, %v1770
        %v1787 = vld [vmem:[#allocation4] sm:$0xff]
        %v1788 = vld [vmem:[#allocation4 + $0x8] sm:$0xff]
        %v1789 = vld [vmem:[#allocation4 + $0x10] sm:$0xff]
        %v1790 = vld [vmem:[#allocation4 + $0x18] sm:$0xff]
        %v1791 = vld [vmem:[#allocation4 + $0x20] sm:$0xff]
        %v1792 = vld [vmem:[#allocation4 + $0x28] sm:$0xff]
        %v1793 = vld [vmem:[#allocation4 + $0x30] sm:$0xff]
        %v1794 = vld [vmem:[#allocation4 + $0x38] sm:$0xff]
        %v1795 = vld [vmem:[#allocation4 + $0x40] sm:$0xff]
        %v1796 = vld [vmem:[#allocation4 + $0x48] sm:$0xff]
        %v1797 = vld [vmem:[#allocation4 + $0x50] sm:$0xff]
        %v1798 = vld [vmem:[#allocation4 + $0x58] sm:$0xff]
        %v1799 = vld [vmem:[#allocation4 + $0x60] sm:$0xff]
        %v1800 = vld [vmem:[#allocation4 + $0x68] sm:$0xff]
        %v1801 = vld [vmem:[#allocation4 + $0x70] sm:$0xff]
        %v1802 = vld [vmem:[#allocation4 + $0x78] sm:$0xff]
        %v1803 = vmul.f32 %v1675, %v1771
        %v1804 = vmul.f32 %v1676, %v1772
        %v1805 = vmul.f32 %v1677, %v1773
        %v1806 = vmul.f32 %v1678, %v1774
        %v1807 = vmul.f32 %v1679, %v1775
        %v1808 = vmul.f32 %v1680, %v1776
        %v1809 = vmul.f32 %v1681, %v1777
        %v1810 = vmul.f32 %v1682, %v1778
        %v1811 = vmul.f32 %v1683, %v1779
        %v1812 = vmul.f32 %v1684, %v1780
        %v1813 = vmul.f32 %v1685, %v1781
        %v1814 = vmul.f32 %v1686, %v1782
        %v1815 = vmul.f32 %v1687, %v1783
        %v1816 = vmul.f32 %v1688, %v1784
        %v1817 = vmul.f32 %v1689, %v1785
        %v1818 = vmul.f32 %v1690, %v1786
        %v1819 = vsub.f32 %v1787, %v1803
        %v1820 = vsub.f32 %v1788, %v1804
        %v1821 = vsub.f32 %v1789, %v1805
        %v1822 = vsub.f32 %v1790, %v1806
        %v1823 = vsub.f32 %v1791, %v1807
        %v1824 = vsub.f32 %v1792, %v1808
        %v1825 = vsub.f32 %v1793, %v1809
        %v1826 = vsub.f32 %v1794, %v1810
        %v1827 = vsub.f32 %v1795, %v1811
        %v1828 = vsub.f32 %v1796, %v1812
        %v1829 = vsub.f32 %v1797, %v1813
        %v1830 = vsub.f32 %v1798, %v1814
        %v1831 = vsub.f32 %v1799, %v1815
        %v1832 = vsub.f32 %v1800, %v1816
        %v1833 = vsub.f32 %v1801, %v1817
        %v1834 = vsub.f32 %v1802, %v1818
        %v1835 = vmax.f32 %v1675, 1.0
        %v1836 = vmax.f32 %v1676, 1.0
        %v1837 = vmax.f32 %v1677, 1.0
        %v1838 = vmax.f32 %v1678, 1.0
        %v1839 = vmax.f32 %v1679, 1.0
        %v1840 = vmax.f32 %v1680, 1.0
        %v1841 = vmax.f32 %v1681, 1.0
        %v1842 = vmax.f32 %v1682, 1.0
        %v1843 = vmax.f32 %v1683, 1.0
        %v1844 = vmax.f32 %v1684, 1.0
        %v1845 = vmax.f32 %v1685, 1.0
        %v1846 = vmax.f32 %v1686, 1.0
        %v1847 = vmax.f32 %v1687, 1.0
        %v1848 = vmax.f32 %v1688, 1.0
        %v1849 = vmax.f32 %v1689, 1.0
        %v1850 = vmax.f32 %v1690, 1.0
        %v1851 = vrcp.pop %v1835
        %v1852 = vmul.f32 %v1835, %v1851
        %v1853 = vsub.f32 1.0, %v1852
        %v1854 = vmul.f32 %v1851, %v1853
        %v1855 = vadd.f32 %v1851, %v1854
        %vm1856 = vweird.f32 %v1835
        %vm1857 = vweird.f32 %v1851
        %vm1858 = vmor %vm1856, %vm1857
        %v1859 = vsel %vm1858, %v1851, %v1855
        %v1860 = vand.u32 2147483647, %v1835
        %vm1861 = vcmp.eq.f32.partialorder %v1860, 8.507059e+37
        %v1862 = vand.u32 %v1835, 2147483648
        %v1863 = vor.u32 1.1754944e-38, %v1862
        %v1864 = vsel %vm1861, %v1863, %v1859
        %v1865 = vmul.f32 %v1819, %v1864
        %v1866 = vrcp.pop %v1836
        %v1867 = vmul.f32 %v1836, %v1866
        %v1868 = vsub.f32 1.0, %v1867
        %v1869 = vmul.f32 %v1866, %v1868
        %v1870 = vadd.f32 %v1866, %v1869
        %vm1871 = vweird.f32 %v1836
        %vm1872 = vweird.f32 %v1866
        %vm1873 = vmor %vm1871, %vm1872
        %v1874 = vsel %vm1873, %v1866, %v1870
        %v1875 = vand.u32 2147483647, %v1836
        %vm1876 = vcmp.eq.f32.partialorder %v1875, 8.507059e+37
        %v1877 = vand.u32 %v1836, 2147483648
        %v1878 = vor.u32 1.1754944e-38, %v1877
        %v1879 = vsel %vm1876, %v1878, %v1874
        %v1880 = vmul.f32 %v1820, %v1879
        %v1881 = vrcp.pop %v1837
        %v1882 = vmul.f32 %v1837, %v1881
        %v1883 = vsub.f32 1.0, %v1882
        %v1884 = vmul.f32 %v1881, %v1883
        %v1885 = vadd.f32 %v1881, %v1884
        %vm1886 = vweird.f32 %v1837
        %vm1887 = vweird.f32 %v1881
        %vm1888 = vmor %vm1886, %vm1887
        %v1889 = vsel %vm1888, %v1881, %v1885
        %v1890 = vand.u32 2147483647, %v1837
        %vm1891 = vcmp.eq.f32.partialorder %v1890, 8.507059e+37
        %v1892 = vand.u32 %v1837, 2147483648
        %v1893 = vor.u32 1.1754944e-38, %v1892
        %v1894 = vsel %vm1891, %v1893, %v1889
        %v1895 = vmul.f32 %v1821, %v1894
        %v1896 = vrcp.pop %v1838
        %v1897 = vmul.f32 %v1838, %v1896
        %v1898 = vsub.f32 1.0, %v1897
        %v1899 = vmul.f32 %v1896, %v1898
        %v1900 = vadd.f32 %v1896, %v1899
        %vm1901 = vweird.f32 %v1838
        %vm1902 = vweird.f32 %v1896
        %vm1903 = vmor %vm1901, %vm1902
        %v1904 = vsel %vm1903, %v1896, %v1900
        %v1905 = vand.u32 2147483647, %v1838
        %vm1906 = vcmp.eq.f32.partialorder %v1905, 8.507059e+37
        %v1907 = vand.u32 %v1838, 2147483648
        %v1908 = vor.u32 1.1754944e-38, %v1907
        %v1909 = vsel %vm1906, %v1908, %v1904
        %v1910 = vmul.f32 %v1822, %v1909
        %v1911 = vrcp.pop %v1839
        %v1912 = vmul.f32 %v1839, %v1911
        %v1913 = vsub.f32 1.0, %v1912
        %v1914 = vmul.f32 %v1911, %v1913
        %v1915 = vadd.f32 %v1911, %v1914
        %vm1916 = vweird.f32 %v1839
        %vm1917 = vweird.f32 %v1911
        %vm1918 = vmor %vm1916, %vm1917
        %v1919 = vsel %vm1918, %v1911, %v1915
        %v1920 = vand.u32 2147483647, %v1839
        %vm1921 = vcmp.eq.f32.partialorder %v1920, 8.507059e+37
        %v1922 = vand.u32 %v1839, 2147483648
        %v1923 = vor.u32 1.1754944e-38, %v1922
        %v1924 = vsel %vm1921, %v1923, %v1919
        %v1925 = vmul.f32 %v1823, %v1924
        %v1926 = vrcp.pop %v1840
        %v1927 = vmul.f32 %v1840, %v1926
        %v1928 = vsub.f32 1.0, %v1927
        %v1929 = vmul.f32 %v1926, %v1928
        %v1930 = vadd.f32 %v1926, %v1929
        %vm1931 = vweird.f32 %v1840
        %vm1932 = vweird.f32 %v1926
        %vm1933 = vmor %vm1931, %vm1932
        %v1934 = vsel %vm1933, %v1926, %v1930
        %v1935 = vand.u32 2147483647, %v1840
        %vm1936 = vcmp.eq.f32.partialorder %v1935, 8.507059e+37
        %v1937 = vand.u32 %v1840, 2147483648
        %v1938 = vor.u32 1.1754944e-38, %v1937
        %v1939 = vsel %vm1936, %v1938, %v1934
        %v1940 = vmul.f32 %v1824, %v1939
        %v1941 = vrcp.pop %v1841
        %v1942 = vmul.f32 %v1841, %v1941
        %v1943 = vsub.f32 1.0, %v1942
        %v1944 = vmul.f32 %v1941, %v1943
        %v1945 = vadd.f32 %v1941, %v1944
        %vm1946 = vweird.f32 %v1841
        %vm1947 = vweird.f32 %v1941
        %vm1948 = vmor %vm1946, %vm1947
        %v1949 = vsel %vm1948, %v1941, %v1945
        %v1950 = vand.u32 2147483647, %v1841
        %vm1951 = vcmp.eq.f32.partialorder %v1950, 8.507059e+37
        %v1952 = vand.u32 %v1841, 2147483648
        %v1953 = vor.u32 1.1754944e-38, %v1952
        %v1954 = vsel %vm1951, %v1953, %v1949
        %v1955 = vmul.f32 %v1825, %v1954
        %v1956 = vrcp.pop %v1842
        %v1957 = vmul.f32 %v1842, %v1956
        %v1958 = vsub.f32 1.0, %v1957
        %v1959 = vmul.f32 %v1956, %v1958
        %v1960 = vadd.f32 %v1956, %v1959
        %vm1961 = vweird.f32 %v1842
        %vm1962 = vweird.f32 %v1956
        %vm1963 = vmor %vm1961, %vm1962
        %v1964 = vsel %vm1963, %v1956, %v1960
        %v1965 = vand.u32 2147483647, %v1842
        %vm1966 = vcmp.eq.f32.partialorder %v1965, 8.507059e+37
        %v1967 = vand.u32 %v1842, 2147483648
        %v1968 = vor.u32 1.1754944e-38, %v1967
        %v1969 = vsel %vm1966, %v1968, %v1964
        %v1970 = vmul.f32 %v1826, %v1969
        %v1971 = vrcp.pop %v1843
        %v1972 = vmul.f32 %v1843, %v1971
        %v1973 = vsub.f32 1.0, %v1972
        %v1974 = vmul.f32 %v1971, %v1973
        %v1975 = vadd.f32 %v1971, %v1974
        %vm1976 = vweird.f32 %v1843
        %vm1977 = vweird.f32 %v1971
        %vm1978 = vmor %vm1976, %vm1977
        %v1979 = vsel %vm1978, %v1971, %v1975
        %v1980 = vand.u32 2147483647, %v1843
        %vm1981 = vcmp.eq.f32.partialorder %v1980, 8.507059e+37
        %v1982 = vand.u32 %v1843, 2147483648
        %v1983 = vor.u32 1.1754944e-38, %v1982
        %v1984 = vsel %vm1981, %v1983, %v1979
        %v1985 = vmul.f32 %v1827, %v1984
        %v1986 = vrcp.pop %v1844
        %v1987 = vmul.f32 %v1844, %v1986
        %v1988 = vsub.f32 1.0, %v1987
        %v1989 = vmul.f32 %v1986, %v1988
        %v1990 = vadd.f32 %v1986, %v1989
        %vm1991 = vweird.f32 %v1844
        %vm1992 = vweird.f32 %v1986
        %vm1993 = vmor %vm1991, %vm1992
        %v1994 = vsel %vm1993, %v1986, %v1990
        %v1995 = vand.u32 2147483647, %v1844
        %vm1996 = vcmp.eq.f32.partialorder %v1995, 8.507059e+37
        %v1997 = vand.u32 %v1844, 2147483648
        %v1998 = vor.u32 1.1754944e-38, %v1997
        %v1999 = vsel %vm1996, %v1998, %v1994
        %v2000 = vmul.f32 %v1828, %v1999
        %v2001 = vrcp.pop %v1845
        %v2002 = vmul.f32 %v1845, %v2001
        %v2003 = vsub.f32 1.0, %v2002
        %v2004 = vmul.f32 %v2001, %v2003
        %v2005 = vadd.f32 %v2001, %v2004
        %vm2006 = vweird.f32 %v1845
        %vm2007 = vweird.f32 %v2001
        %vm2008 = vmor %vm2006, %vm2007
        %v2009 = vsel %vm2008, %v2001, %v2005
        %v2010 = vand.u32 2147483647, %v1845
        %vm2011 = vcmp.eq.f32.partialorder %v2010, 8.507059e+37
        %v2012 = vand.u32 %v1845, 2147483648
        %v2013 = vor.u32 1.1754944e-38, %v2012
        %v2014 = vsel %vm2011, %v2013, %v2009
        %v2015 = vmul.f32 %v1829, %v2014
        %v2016 = vrcp.pop %v1846
        %v2017 = vmul.f32 %v1846, %v2016
        %v2018 = vsub.f32 1.0, %v2017
        %v2019 = vmul.f32 %v2016, %v2018
        %v2020 = vadd.f32 %v2016, %v2019
        %vm2021 = vweird.f32 %v1846
        %vm2022 = vweird.f32 %v2016
        %vm2023 = vmor %vm2021, %vm2022
        %v2024 = vsel %vm2023, %v2016, %v2020
        %v2025 = vand.u32 2147483647, %v1846
        %vm2026 = vcmp.eq.f32.partialorder %v2025, 8.507059e+37
        %v2027 = vand.u32 %v1846, 2147483648
        %v2028 = vor.u32 1.1754944e-38, %v2027
        %v2029 = vsel %vm2026, %v2028, %v2024
        %v2030 = vmul.f32 %v1830, %v2029
        %v2031 = vrcp.pop %v1847
        %v2032 = vmul.f32 %v1847, %v2031
        %v2033 = vsub.f32 1.0, %v2032
        %v2034 = vmul.f32 %v2031, %v2033
        %v2035 = vadd.f32 %v2031, %v2034
        %vm2036 = vweird.f32 %v1847
        %vm2037 = vweird.f32 %v2031
        %vm2038 = vmor %vm2036, %vm2037
        %v2039 = vsel %vm2038, %v2031, %v2035
        %v2040 = vand.u32 2147483647, %v1847
        %vm2041 = vcmp.eq.f32.partialorder %v2040, 8.507059e+37
        %v2042 = vand.u32 %v1847, 2147483648
        %v2043 = vor.u32 1.1754944e-38, %v2042
        %v2044 = vsel %vm2041, %v2043, %v2039
        %v2045 = vmul.f32 %v1831, %v2044
        %v2046 = vrcp.pop %v1848
        %v2047 = vmul.f32 %v1848, %v2046
        %v2048 = vsub.f32 1.0, %v2047
        %v2049 = vmul.f32 %v2046, %v2048
        %v2050 = vadd.f32 %v2046, %v2049
        %vm2051 = vweird.f32 %v1848
        %vm2052 = vweird.f32 %v2046
        %vm2053 = vmor %vm2051, %vm2052
        %v2054 = vsel %vm2053, %v2046, %v2050
        %v2055 = vand.u32 2147483647, %v1848
        %vm2056 = vcmp.eq.f32.partialorder %v2055, 8.507059e+37
        %v2057 = vand.u32 %v1848, 2147483648
        %v2058 = vor.u32 1.1754944e-38, %v2057
        %v2059 = vsel %vm2056, %v2058, %v2054
        %v2060 = vmul.f32 %v1832, %v2059
        %v2061 = vrcp.pop %v1849
        %v2062 = vmul.f32 %v1849, %v2061
        %v2063 = vsub.f32 1.0, %v2062
        %v2064 = vmul.f32 %v2061, %v2063
        %v2065 = vadd.f32 %v2061, %v2064
        %vm2066 = vweird.f32 %v1849
        %vm2067 = vweird.f32 %v2061
        %vm2068 = vmor %vm2066, %vm2067
        %v2069 = vsel %vm2068, %v2061, %v2065
        %v2070 = vand.u32 2147483647, %v1849
        %vm2071 = vcmp.eq.f32.partialorder %v2070, 8.507059e+37
        %v2072 = vand.u32 %v1849, 2147483648
        %v2073 = vor.u32 1.1754944e-38, %v2072
        %v2074 = vsel %vm2071, %v2073, %v2069
        %v2075 = vmul.f32 %v1833, %v2074
        %v2076 = vrcp.pop %v1850
        %v2077 = vmul.f32 %v1850, %v2076
        %v2078 = vsub.f32 1.0, %v2077
        %v2079 = vmul.f32 %v2076, %v2078
        %v2080 = vadd.f32 %v2076, %v2079
        %vm2081 = vweird.f32 %v1850
        %vm2082 = vweird.f32 %v2076
        %vm2083 = vmor %vm2081, %vm2082
        %v2084 = vsel %vm2083, %v2076, %v2080
        %v2085 = vand.u32 2147483647, %v1850
        %vm2086 = vcmp.eq.f32.partialorder %v2085, 8.507059e+37
        %v2087 = vand.u32 %v1850, 2147483648
        %v2088 = vor.u32 1.1754944e-38, %v2087
        %v2089 = vsel %vm2086, %v2088, %v2084
        %v2090 = vmul.f32 %v1834, %v2089
        %vm2091 = vcmp.gt.f32.partialorder %v1675, 0.0
        %vm2092 = vcmp.gt.f32.partialorder %v1676, 0.0
        %vm2093 = vcmp.gt.f32.partialorder %v1677, 0.0
        %vm2094 = vcmp.gt.f32.partialorder %v1678, 0.0
        %vm2095 = vcmp.gt.f32.partialorder %v1679, 0.0
        %vm2096 = vcmp.gt.f32.partialorder %v1680, 0.0
        %vm2097 = vcmp.gt.f32.partialorder %v1681, 0.0
        %vm2098 = vcmp.gt.f32.partialorder %v1682, 0.0
        %vm2099 = vcmp.gt.f32.partialorder %v1683, 0.0
        %vm2100 = vcmp.gt.f32.partialorder %v1684, 0.0
        %vm2101 = vcmp.gt.f32.partialorder %v1685, 0.0
        %vm2102 = vcmp.gt.f32.partialorder %v1686, 0.0
        %vm2103 = vcmp.gt.f32.partialorder %v1687, 0.0
        %vm2104 = vcmp.gt.f32.partialorder %v1688, 0.0
        %vm2105 = vcmp.gt.f32.partialorder %v1689, 0.0
        %vm2106 = vcmp.gt.f32.partialorder %v1690, 0.0
        %v2107 = vsel %vm2091, 1, 0
        %v2108 = vsel %vm2092, 1, 0
        %v2109 = vsel %vm2093, 1, 0
        %v2110 = vsel %vm2094, 1, 0
        %v2111 = vsel %vm2095, 1, 0
        %v2112 = vsel %vm2096, 1, 0
        %v2113 = vsel %vm2097, 1, 0
        %v2114 = vsel %vm2098, 1, 0
        %v2115 = vsel %vm2099, 1, 0
        %v2116 = vsel %vm2100, 1, 0
        %v2117 = vsel %vm2101, 1, 0
        %v2118 = vsel %vm2102, 1, 0
        %v2119 = vsel %vm2103, 1, 0
        %v2120 = vsel %vm2104, 1, 0
        %v2121 = vsel %vm2105, 1, 0
        %v2122 = vsel %vm2106, 1, 0
        %v2123 = vcvt.s32.f32 %v2107
        %v2124 = vcvt.s32.f32 %v2108
        %v2125 = vcvt.s32.f32 %v2109
        %v2126 = vcvt.s32.f32 %v2110
        %v2127 = vcvt.s32.f32 %v2111
        %v2128 = vcvt.s32.f32 %v2112
        %v2129 = vcvt.s32.f32 %v2113
        %v2130 = vcvt.s32.f32 %v2114
        %v2131 = vcvt.s32.f32 %v2115
        %v2132 = vcvt.s32.f32 %v2116
        %v2133 = vcvt.s32.f32 %v2117
        %v2134 = vcvt.s32.f32 %v2118
        %v2135 = vcvt.s32.f32 %v2119
        %v2136 = vcvt.s32.f32 %v2120
        %v2137 = vcvt.s32.f32 %v2121
        %v2138 = vcvt.s32.f32 %v2122
        %v2139 = vmul.f32 %v2123, %v1865
        %v2140 = vmul.f32 %v2124, %v1880
        %v2141 = vmul.f32 %v2125, %v1895
        %v2142 = vmul.f32 %v2126, %v1910
        %v2143 = vmul.f32 %v2127, %v1925
        %v2144 = vmul.f32 %v2128, %v1940
        %v2145 = vmul.f32 %v2129, %v1955
        %v2146 = vmul.f32 %v2130, %v1970
        %v2147 = vmul.f32 %v2131, %v1985
        %v2148 = vmul.f32 %v2132, %v2000
        %v2149 = vmul.f32 %v2133, %v2015
        %v2150 = vmul.f32 %v2134, %v2030
        %v2151 = vmul.f32 %v2135, %v2045
        %v2152 = vmul.f32 %v2136, %v2060
        %v2153 = vmul.f32 %v2137, %v2075
        %v2154 = vmul.f32 %v2138, %v2090
        %2155 = vst.msk [vmem:[%s309] sm:$0xff] %vm1220, %v2139
        %2156 = vst.msk [vmem:[%s309 + $0x8] sm:$0xff] %vm1220, %v2140
        %2157 = vst.msk [vmem:[%s309 + $0x10] sm:$0xff] %vm1220, %v2141
        %2158 = vst.msk [vmem:[%s309 + $0x18] sm:$0xff] %vm1220, %v2142
        %2159 = vst.msk [vmem:[%s309 + $0x20] sm:$0xff] %vm1220, %v2143
        %2160 = vst.msk [vmem:[%s309 + $0x28] sm:$0xff] %vm1220, %v2144
        %2161 = vst.msk [vmem:[%s309 + $0x30] sm:$0xff] %vm1220, %v2145
        %2162 = vst.msk [vmem:[%s309 + $0x38] sm:$0xff] %vm1220, %v2146
        %2163 = vst.msk [vmem:[%s309 + $0x40] sm:$0xff] %vm1220, %v2147
        %2164 = vst.msk [vmem:[%s309 + $0x48] sm:$0xff] %vm1220, %v2148
        %2165 = vst.msk [vmem:[%s309 + $0x50] sm:$0xff] %vm1220, %v2149
        %2166 = vst.msk [vmem:[%s309 + $0x58] sm:$0xff] %vm1220, %v2150
        %2167 = vst.msk [vmem:[%s309 + $0x60] sm:$0xff] %vm1220, %v2151
        %2168 = vst.msk [vmem:[%s309 + $0x68] sm:$0xff] %vm1220, %v2152
        %2169 = vst.msk [vmem:[%s309 + $0x70] sm:$0xff] %vm1220, %v2153
        %2170 = vst.msk [vmem:[%s309 + $0x78] sm:$0xff] %vm1220, %v2154
        %2171 = vst.msk [vmem:[%s315] sm:$0xff] %vm1220, %v2123
        %2172 = vst.msk [vmem:[%s315 + $0x8] sm:$0xff] %vm1220, %v2124
        %2173 = vst.msk [vmem:[%s315 + $0x10] sm:$0xff] %vm1220, %v2125
        %2174 = vst.msk [vmem:[%s315 + $0x18] sm:$0xff] %vm1220, %v2126
        %2175 = vst.msk [vmem:[%s315 + $0x20] sm:$0xff] %vm1220, %v2127
        %2176 = vst.msk [vmem:[%s315 + $0x28] sm:$0xff] %vm1220, %v2128
        %2177 = vst.msk [vmem:[%s315 + $0x30] sm:$0xff] %vm1220, %v2129
        %2178 = vst.msk [vmem:[%s315 + $0x38] sm:$0xff] %vm1220, %v2130
        %2179 = vst.msk [vmem:[%s315 + $0x40] sm:$0xff] %vm1220, %v2131
        %2180 = vst.msk [vmem:[%s315 + $0x48] sm:$0xff] %vm1220, %v2132
        %2181 = vst.msk [vmem:[%s315 + $0x50] sm:$0xff] %vm1220, %v2133
        %2182 = vst.msk [vmem:[%s315 + $0x58] sm:$0xff] %vm1220, %v2134
        %2183 = vst.msk [vmem:[%s315 + $0x60] sm:$0xff] %vm1220, %v2135
        %2184 = vst.msk [vmem:[%s315 + $0x68] sm:$0xff] %vm1220, %v2136
        %2185 = vst.msk [vmem:[%s315 + $0x70] sm:$0xff] %vm1220, %v2137
        %2186 = vst.msk [vmem:[%s315 + $0x78] sm:$0xff] %vm1220, %v2138
      $region44: #{tpu_custom_call.1} parent=35 // pred_fallthru
        _
      %s2187 = smul.u32 16, %s21
      %p2188 = scmp.lt.s32.totalorder %s2187, 31
      %s2189 = scalar_select %p2188, %s2187, 31
      %s2190 = smul.addr %s2189, 8
      %s2191 = scalar_lea.vmem %s4, %s2190
      %s2192 = smul.u32 16, %s21
      %p2193 = scmp.lt.s32.totalorder %s2192, 31
      %s2194 = scalar_select %p2193, %s2192, 31
      %s2195 = smul.addr %s2194, 8
      %s2196 = scalar_lea.vmem %s5, %s2195
      // Predicated region
      $region45: #{tpu_custom_call.1} parent=35 // pred_check
        %p2197 = pneg %p151
      $region46: #{tpu_custom_call.1} parent=35 // pred_check_branch
        %2199 = sbr.rel (%p2197) target = $region48
      $region47: #{tpu_custom_call.1} parent=35 // pred_region
        %s2200 = smul.u32 16, %s21
      $region48: #{tpu_custom_call.1} parent=35 // pred_fallthru
        _
      // Predicated region
      $region49: #{tpu_custom_call.1} parent=35 // pred_check
        %p2201 = pneg %p177
      $region50: #{tpu_custom_call.1} parent=35 // pred_check_branch
        %2203 = sbr.rel (%p2201) target = $region52
      $region51: #{tpu_custom_call.1} parent=35 // pred_region
        %s2204 = smul.u32 16, %s21
      $region52: #{tpu_custom_call.1} parent=35 // pred_fallthru
        _
    $region36: #{tpu_custom_call.1} parent=5 // pred_fallthru
      _
    %p2205 = scmp.le.s32.totalorder 2, %s12
    // Predicated region
    $region53: #{tpu_custom_call.1} parent=5 // pred_check
      %p2206 = pneg %p2205
    $region54: #{tpu_custom_call.1} parent=5 // pred_check_branch
      %2208 = sbr.rel (%p2206) target = $region56
    $region55: #{tpu_custom_call.1} parent=5 // pred_region
      %s2209 = ssub.s32 %s12, 2
      // Predicated region
      $region57: #{tpu_custom_call.1} parent=55 // pred_check
        %p2210 = pneg %p157
      $region58: #{tpu_custom_call.1} parent=55 // pred_check_branch
        %2212 = sbr.rel (%p2210) target = $region60
      $region59: #{tpu_custom_call.1} parent=55 // pred_region
        %s2213 = smul.u32 16, %s23
        %p2214 = scmp.lt.s32.totalorder %s2213, 31
        %s2215 = scalar_select %p2214, %s2213, 31
        %s2216 = smul.addr %s2215, 8
        %s2217 = scalar_lea.vmem %s4, %s2216
      $region60: #{tpu_custom_call.1} parent=55 // pred_fallthru
        _
      // Predicated region
      $region61: #{tpu_custom_call.1} parent=55 // pred_check
        %p2218 = pneg %p183
      $region62: #{tpu_custom_call.1} parent=55 // pred_check_branch
        %2220 = sbr.rel (%p2218) target = $region64
      $region63: #{tpu_custom_call.1} parent=55 // pred_region
        %s2221 = smul.u32 16, %s23
        %p2222 = scmp.lt.s32.totalorder %s2221, 31
        %s2223 = scalar_select %p2222, %s2221, 31
        %s2224 = smul.addr %s2223, 8
        %s2225 = scalar_lea.vmem %s5, %s2224
      $region64: #{tpu_custom_call.1} parent=55 // pred_fallthru
        _
    $region56: #{tpu_custom_call.1} parent=5 // pred_fallthru
      _
  $region6: #{tpu_custom_call.1} parent=0 // loop_footer
    %s16 = sadd.s32 1, %s12
  $region7: #{tpu_custom_call.1} parent=0 // loop_footer_branch
    %11 = sbr.rel target = $region3
  $region8: #{tpu_custom_call.1} parent=0 // loop_exit
    _

</llo_original>
